<compile_context>
chip_gen: v5e
topology: v5e:2x2
jax: 0.10.0
libtpu: 0.0.40
codegen_flags: <defaults>
</compile_context>

<pallas_src>
import jax
import jax.numpy as jnp
from jax.experimental import pallas as pl
from jax.experimental.pallas import tpu as pltpu

EMB = 64
LAYERS = (256, 128, 64)
GROWTH = 100
TB = 512  # max batch tile (lanes); multiple of 128

# Static offsets into the packed bias column [b1 | b2 | b3 | woh | bo].
_O1 = LAYERS[0]                # 256
_O2 = _O1 + LAYERS[1]          # 384
_O3 = _O2 + LAYERS[2]          # 448
_O4 = _O3 + LAYERS[2]          # 512  (woh has layers[-1] rows)
_O5 = _O4 + 1                  # 513


def ncf_kernel(idx_ref, riota_ref, tab_ref, w1_ref, w2_ref, w3_ref, bias_ref,
               out_ref):
    tb = out_ref.shape[1]

    # ---- fused embedding gather: one one-hot compare + one MXU pass -------
    idx = idx_ref[...]                                        # (1, 2*tb) int32
    onehot = (riota_ref[...] == idx).astype(jnp.bfloat16)     # (V, 2*tb)
    emb = jnp.dot(tab_ref[...], onehot,
                  preferred_element_type=jnp.float32)         # (2*EMB, 2*tb) f32

    u_all = emb[:, :tb]   # user: rows [:EMB] = wog*gmf_embed, [EMB:] = mlp_embed
    i_all = emb[:, tb:]   # item: rows [:EMB] = gmf_embed,     [EMB:] = mlp_embed

    # ---- GMF branch (output-layer gmf weights folded into user table) -----
    gmf_term = jnp.sum(u_all[:EMB, :] * i_all[:EMB, :],
                       axis=0, keepdims=True)                 # (1, tb) f32

    # ---- MLP branch: single K=128 layer-1 matmul ---------------------------
    mlp_in = jnp.concatenate(
        [u_all[EMB:, :].astype(jnp.bfloat16),
         i_all[EMB:, :].astype(jnp.bfloat16)], axis=0)        # (2*EMB, tb) bf16

    b1 = bias_ref[0:_O1, :]        # (256, 1)
    b2 = bias_ref[_O1:_O2, :]      # (128, 1)
    b3 = bias_ref[_O2:_O3, :]      # (64, 1)
    woh = bias_ref[_O3:_O4, :]     # (64, 1)
    bo = bias_ref[_O4:_O5, :]      # (1, 1)

    h = jnp.maximum(
        jnp.dot(w1_ref[...], mlp_in, preferred_element_type=jnp.float32) + b1,
        0.0)                                                  # (256, tb)
    h = jnp.maximum(
        jnp.dot(w2_ref[...], h.astype(jnp.bfloat16),
                preferred_element_type=jnp.float32) + b2, 0.0)  # (128, tb)
    h = jnp.maximum(
        jnp.dot(w3_ref[...], h.astype(jnp.bfloat16),
                preferred_element_type=jnp.float32) + b3, 0.0)  # (64, tb)

    # ---- output layer: VPU multiply + sublane (XLU) reduce -> (1, tb) ------
    logit = gmf_term + jnp.sum(h * woh, axis=0, keepdims=True) + bo
    out_ref[...] = jax.nn.sigmoid(logit)


def init_params(key, n_users, n_items, emb=EMB, layers=LAYERS, growth=GROWTH):
    """PyTorch-layout parameters: embeddings (V, emb), Linear weights (out, in)."""
    n_u = n_users + growth
    keys = jax.random.split(key, 8)

    def kaiming_uniform(k, out_f, in_f):
        # nn.init.kaiming_uniform_ defaults (a=0): bound = sqrt(6 / fan_in)
        bound = jnp.sqrt(6.0 / in_f)
        return jax.random.uniform(k, (out_f, in_f), jnp.float32, -bound, bound)

    p = {
        'ug': 0.01 * jax.random.normal(keys[0], (n_u, emb), jnp.float32),
        'ig': 0.01 * jax.random.normal(keys[1], (n_items, emb), jnp.float32),
        'um': 0.01 * jax.random.normal(keys[2], (n_u, emb), jnp.float32),
        'im': 0.01 * jax.random.normal(keys[3], (n_items, emb), jnp.float32),
    }
    in_size = 2 * emb
    for i, size in enumerate(layers):
        p[f'w{i + 1}'] = kaiming_uniform(keys[4 + i], size, in_size)
        p[f'b{i + 1}'] = jnp.zeros((size,), jnp.float32)
        in_size = size
    p['wo'] = kaiming_uniform(keys[7], 1, layers[-1] + emb)
    p['bo'] = jnp.zeros((1,), jnp.float32)
    return p


def pack_params(p, emb=EMB):
    """Kernel layout: one fused transposed bf16 table, bf16 weights, packed f32 biases."""
    n_u = p['ug'].shape[0]
    n_i = p['ig'].shape[0]
    wo = p['wo']                                   # (1, emb + layers[-1]), in = [gmf | mlp]

    # Fold the GMF half of the output layer into the user GMF embedding rows.
    ug_scaled = p['ug'] * wo[0, :emb][None, :]
    utab = jnp.concatenate([ug_scaled, p['um']], axis=1)   # (n_u, 2*emb)
    itab = jnp.concatenate([p['ig'], p['im']], axis=1)     # (n_i, 2*emb)
    tab = jnp.concatenate([utab, itab], axis=0).T.astype(jnp.bfloat16)  # (2*emb, n_u+n_i)

    bias = jnp.concatenate(
        [p['b1'], p['b2'], p['b3'], wo[0, emb:], p['bo']]).reshape(-1, 1)

    return {
        'tab': tab,
        'riota': jnp.arange(n_u + n_i, dtype=jnp.int32).reshape(-1, 1),
        'w1': p['w1'].astype(jnp.bfloat16),    # (256, 128), in = [user_mlp | item_mlp]
        'w2': p['w2'].astype(jnp.bfloat16),    # (128, 256)
        'w3': p['w3'].astype(jnp.bfloat16),    # (64, 128)
        'bias': bias.astype(jnp.float32),      # (513, 1)
        'item_offset': n_u,                    # item row offset into the fused table
    }


def _round_up(x, m):
    return ((x + m - 1) // m) * m


def ncf_forward(packed, user_indices, item_indices, *, tb_max=TB):
    B = user_indices.shape[0]
    # Big tile amortizes per-grid-step overhead; shrink to a 128-multiple for
    # tiny batches.  Batches > tb_max produce >=2 tiles, so the "parallel"
    # grid axis shards across both v7x TensorCores.
    tb = min(tb_max, _round_up(B, 128))
    n_tiles = pl.cdiv(B, tb)
    b_pad = n_tiles * tb

    # Pad with index 0 (valid row; padded lanes produce garbage that is discarded).
    u = jnp.zeros((b_pad,), jnp.int32).at[:B].set(user_indices.astype(jnp.int32))
    it = jnp.zeros((b_pad,), jnp.int32).at[:B].set(
        item_indices.astype(jnp.int32) + packed['item_offset'])
    # Per-tile lane layout: [user (0:tb) | item (tb:2tb)].
    idx = jnp.stack([u.reshape(n_tiles, tb), it.reshape(n_tiles, tb)],
                    axis=1).reshape(1, n_tiles * 2 * tb)

    weights = [packed['riota'], packed['tab'], packed['w1'], packed['w2'],
               packed['w3'], packed['bias']]

    def resident(x):
        # Full-shape block, constant index_map -> VMEM-resident across the grid.
        return pl.BlockSpec(x.shape, lambda i: (0, 0))

    out = pl.pallas_call(
        ncf_kernel,
        out_shape=jax.ShapeDtypeStruct((1, b_pad), jnp.float32),
        grid_spec=pltpu.PrefetchScalarGridSpec(
            num_scalar_prefetch=0,
            grid=(n_tiles,),
            in_specs=[pl.BlockSpec((1, 2 * tb), lambda i: (0, i))]
                     + [resident(w) for w in weights],
            out_specs=pl.BlockSpec((1, tb), lambda i: (0, i)),
        ),
        compiler_params=pltpu.CompilerParams(
            dimension_semantics=("parallel",),
            vmem_limit_bytes=32 * 1024 * 1024,  # safe on all gens incl. v7x (64 MiB phys)
        ),
    )(idx, *weights)

    return out[0, :B]  # matches torch .squeeze() of (B, 1)


if __name__ == "__main__":
    key = jax.random.PRNGKey(0)
    n_users, n_items, batch = 20, 50, 8

    pkey, ukey, ikey = jax.random.split(key, 3)
    params = init_params(pkey, n_users, n_items)
    packed = pack_params(params)

    user_idx = jax.random.randint(ukey, (batch,), 0, n_users, dtype=jnp.int32)
    item_idx = jax.random.randint(ikey, (batch,), 0, n_items, dtype=jnp.int32)

    out = jax.jit(ncf_forward)(packed, user_idx, item_idx)
    jax.block_until_ready(out)

    assert out.shape == (batch,)
    assert bool(jnp.all((out >= 0.0) & (out <= 1.0)))
    print("KERNEL_OK")
</pallas_src>

<mosaic_0001>
module attributes {stable_mosaic.version = 11 : i64} {
  func.func @ncf_kernel(%arg0: i32, %arg1: memref<1x256xi32, #tpu.memory_space<vmem>>, %arg2: memref<170x1xi32, #tpu.memory_space<vmem>>, %arg3: memref<128x170xbf16, #tpu.memory_space<vmem>>, %arg4: memref<256x128xbf16, #tpu.memory_space<vmem>>, %arg5: memref<128x256xbf16, #tpu.memory_space<vmem>>, %arg6: memref<64x128xbf16, #tpu.memory_space<vmem>>, %arg7: memref<513x1xf32, #tpu.memory_space<vmem>>, %arg8: memref<1x128xf32, #tpu.memory_space<vmem>>) attributes {dimension_semantics = [#tpu.dimension_semantics<parallel>], iteration_bounds = array<i64: 1>, scalar_prefetch = 0 : i64, scratch_operands = 0 : i64, tpu.core_type = #tpu.core_type<tc>, window_params = [{transform_indices = @transform_0, window_bounds = array<i64: 1, 256>}, {pipeline_mode = #tpu.pipeline_mode<synchronous>, transform_indices = @transform_1, window_bounds = array<i64: 170, 1>}, {pipeline_mode = #tpu.pipeline_mode<synchronous>, transform_indices = @transform_2, window_bounds = array<i64: 128, 170>}, {pipeline_mode = #tpu.pipeline_mode<synchronous>, transform_indices = @transform_3, window_bounds = array<i64: 256, 128>}, {pipeline_mode = #tpu.pipeline_mode<synchronous>, transform_indices = @transform_4, window_bounds = array<i64: 128, 256>}, {pipeline_mode = #tpu.pipeline_mode<synchronous>, transform_indices = @transform_5, window_bounds = array<i64: 64, 128>}, {pipeline_mode = #tpu.pipeline_mode<synchronous>, transform_indices = @transform_6, window_bounds = array<i64: 513, 1>}, {transform_indices = @transform_7, window_bounds = array<i64: 1, 128>}]} {
    %c0 = arith.constant 0 : index
    %c0_0 = arith.constant 0 : index
    %0 = vector.load %arg1[%c0, %c0_0] : memref<1x256xi32, #tpu.memory_space<vmem>>, vector<1x256xi32>
    %c0_1 = arith.constant 0 : index
    %c0_2 = arith.constant 0 : index
    %1 = vector.load %arg2[%c0_1, %c0_2] : memref<170x1xi32, #tpu.memory_space<vmem>>, vector<170x1xi32>
    %2 = vector.broadcast %1 : vector<170x1xi32> to vector<170x256xi32>
    %3 = vector.broadcast %0 : vector<1x256xi32> to vector<170x256xi32>
    %4 = arith.cmpi eq, %2, %3 : vector<170x256xi32>
    %5 = arith.extui %4 : vector<170x256xi1> to vector<170x256xi32>
    %6 = arith.sitofp %5 : vector<170x256xi32> to vector<170x256xf32>
    %7 = arith.truncf %6 : vector<170x256xf32> to vector<170x256xbf16>
    %c0_3 = arith.constant 0 : index
    %c0_4 = arith.constant 0 : index
    %8 = vector.load %arg3[%c0_3, %c0_4] : memref<128x170xbf16, #tpu.memory_space<vmem>>, vector<128x170xbf16>
    %cst = arith.constant dense<0.000000e+00> : vector<128x256xf32>
    %9 = tpu.matmul %8, %7, %cst {dimension_numbers = #tpu.dot_dimension_numbers<[1], [0], [0], [1], [0, 0, 1, 1], [], []>} : vector<128x170xbf16>, vector<170x256xbf16>, vector<128x256xf32> -> vector<128x256xf32>
    %10 = vector.extract_strided_slice %9 {offsets = [0, 0], sizes = [128, 128], strides = [1, 1]} : vector<128x256xf32> to vector<128x128xf32>
    %11 = vector.extract_strided_slice %9 {offsets = [0, 128], sizes = [128, 128], strides = [1, 1]} : vector<128x256xf32> to vector<128x128xf32>
    %12 = vector.extract_strided_slice %10 {offsets = [0, 0], sizes = [64, 128], strides = [1, 1]} : vector<128x128xf32> to vector<64x128xf32>
    %13 = vector.extract_strided_slice %11 {offsets = [0, 0], sizes = [64, 128], strides = [1, 1]} : vector<128x128xf32> to vector<64x128xf32>
    %14 = arith.mulf %12, %13 : vector<64x128xf32>
    %cst_5 = arith.constant dense<0.000000e+00> : vector<128xf32>
    %15 = vector.multi_reduction <add>, %14, %cst_5 [0] : vector<64x128xf32> to vector<128xf32>
    %16 = vector.shape_cast %15 : vector<128xf32> to vector<1x128xf32>
    %17 = vector.extract_strided_slice %10 {offsets = [64, 0], sizes = [64, 128], strides = [1, 1]} : vector<128x128xf32> to vector<64x128xf32>
    %18 = arith.truncf %17 : vector<64x128xf32> to vector<64x128xbf16>
    %19 = vector.extract_strided_slice %11 {offsets = [64, 0], sizes = [64, 128], strides = [1, 1]} : vector<128x128xf32> to vector<64x128xf32>
    %20 = arith.truncf %19 : vector<64x128xf32> to vector<64x128xbf16>
    %21 = tpu.concatenate %18, %20 in 0 : vector<64x128xbf16>, vector<64x128xbf16> -> vector<128x128xbf16>
    %c0_6 = arith.constant 0 : index
    %c0_7 = arith.constant 0 : index
    %22 = vector.load %arg7[%c0_6, %c0_7] : memref<513x1xf32, #tpu.memory_space<vmem>>, vector<256x1xf32>
    %c256 = arith.constant 256 : index
    %c0_8 = arith.constant 0 : index
    %23 = vector.load %arg7[%c256, %c0_8] : memref<513x1xf32, #tpu.memory_space<vmem>>, vector<128x1xf32>
    %c384 = arith.constant 384 : index
    %c0_9 = arith.constant 0 : index
    %24 = vector.load %arg7[%c384, %c0_9] : memref<513x1xf32, #tpu.memory_space<vmem>>, vector<64x1xf32>
    %c448 = arith.constant 448 : index
    %c0_10 = arith.constant 0 : index
    %25 = vector.load %arg7[%c448, %c0_10] : memref<513x1xf32, #tpu.memory_space<vmem>>, vector<64x1xf32>
    %c512 = arith.constant 512 : index
    %c0_11 = arith.constant 0 : index
    %26 = vector.load %arg7[%c512, %c0_11] : memref<513x1xf32, #tpu.memory_space<vmem>>, vector<1x1xf32>
    %c0_12 = arith.constant 0 : index
    %c0_13 = arith.constant 0 : index
    %27 = vector.load %arg4[%c0_12, %c0_13] : memref<256x128xbf16, #tpu.memory_space<vmem>>, vector<256x128xbf16>
    %cst_14 = arith.constant dense<0.000000e+00> : vector<256x128xf32>
    %28 = tpu.matmul %27, %21, %cst_14 {dimension_numbers = #tpu.dot_dimension_numbers<[1], [0], [0], [1], [0, 0, 1, 1], [], []>} : vector<256x128xbf16>, vector<128x128xbf16>, vector<256x128xf32> -> vector<256x128xf32>
    %29 = vector.broadcast %22 : vector<256x1xf32> to vector<256x128xf32>
    %30 = arith.addf %28, %29 : vector<256x128xf32>
    %cst_15 = arith.constant 0.000000e+00 : f32
    %31 = vector.broadcast %cst_15 : f32 to vector<256x128xf32>
    %32 = arith.maximumf %30, %31 : vector<256x128xf32>
    %c0_16 = arith.constant 0 : index
    %c0_17 = arith.constant 0 : index
    %33 = vector.load %arg5[%c0_16, %c0_17] : memref<128x256xbf16, #tpu.memory_space<vmem>>, vector<128x256xbf16>
    %34 = arith.truncf %32 : vector<256x128xf32> to vector<256x128xbf16>
    %cst_18 = arith.constant dense<0.000000e+00> : vector<128x128xf32>
    %35 = tpu.matmul %33, %34, %cst_18 {dimension_numbers = #tpu.dot_dimension_numbers<[1], [0], [0], [1], [0, 0, 1, 1], [], []>} : vector<128x256xbf16>, vector<256x128xbf16>, vector<128x128xf32> -> vector<128x128xf32>
    %36 = vector.broadcast %23 : vector<128x1xf32> to vector<128x128xf32>
    %37 = arith.addf %35, %36 : vector<128x128xf32>
    %cst_19 = arith.constant 0.000000e+00 : f32
    %38 = vector.broadcast %cst_19 : f32 to vector<128x128xf32>
    %39 = arith.maximumf %37, %38 : vector<128x128xf32>
    %c0_20 = arith.constant 0 : index
    %c0_21 = arith.constant 0 : index
    %40 = vector.load %arg6[%c0_20, %c0_21] : memref<64x128xbf16, #tpu.memory_space<vmem>>, vector<64x128xbf16>
    %41 = arith.truncf %39 : vector<128x128xf32> to vector<128x128xbf16>
    %cst_22 = arith.constant dense<0.000000e+00> : vector<64x128xf32>
    %42 = tpu.matmul %40, %41, %cst_22 {dimension_numbers = #tpu.dot_dimension_numbers<[1], [0], [0], [1], [0, 0, 1, 1], [], []>} : vector<64x128xbf16>, vector<128x128xbf16>, vector<64x128xf32> -> vector<64x128xf32>
    %43 = vector.broadcast %24 : vector<64x1xf32> to vector<64x128xf32>
    %44 = arith.addf %42, %43 : vector<64x128xf32>
    %cst_23 = arith.constant 0.000000e+00 : f32
    %45 = vector.broadcast %cst_23 : f32 to vector<64x128xf32>
    %46 = arith.maximumf %44, %45 : vector<64x128xf32>
    %47 = vector.broadcast %25 : vector<64x1xf32> to vector<64x128xf32>
    %48 = arith.mulf %46, %47 : vector<64x128xf32>
    %cst_24 = arith.constant dense<0.000000e+00> : vector<128xf32>
    %49 = vector.multi_reduction <add>, %48, %cst_24 [0] : vector<64x128xf32> to vector<128xf32>
    %50 = vector.shape_cast %49 : vector<128xf32> to vector<1x128xf32>
    %51 = arith.addf %16, %50 : vector<1x128xf32>
    %52 = vector.broadcast %26 : vector<1x1xf32> to vector<1x128xf32>
    %53 = arith.addf %51, %52 : vector<1x128xf32>
    %54 = arith.negf %53 : vector<1x128xf32>
    %55 = math.exp %54 : vector<1x128xf32>
    %cst_25 = arith.constant 1.000000e+00 : f32
    %56 = vector.broadcast %cst_25 : f32 to vector<1x128xf32>
    %57 = arith.addf %56, %55 : vector<1x128xf32>
    %58 = arith.divf %56, %57 : vector<1x128xf32>
    %c0_26 = arith.constant 0 : index
    %c0_27 = arith.constant 0 : index
    %59 = vector.load %arg8[%c0_26, %c0_27] : memref<1x128xf32, #tpu.memory_space<vmem>>, vector<1x128xf32>
    tpu.vector_store %arg8[%c0_26, %c0_27], %58 {strides = array<i32>} : memref<1x128xf32, #tpu.memory_space<vmem>>, vector<1x128xf32>,
    return
  }
  func.func @transform_0(%arg0: i32) -> (i32, i32) {
    %c0_i32 = arith.constant 0 : i32
    %c0_i32_0 = arith.constant 0 : i32
    return %c0_i32, %arg0 : i32, i32
  }
  func.func @transform_1(%arg0: i32) -> (i32, i32) {
    %c0_i32 = arith.constant 0 : i32
    %c0_i32_0 = arith.constant 0 : i32
    %c0_i32_1 = arith.constant 0 : i32
    return %c0_i32, %c0_i32_0 : i32, i32
  }
  func.func @transform_2(%arg0: i32) -> (i32, i32) {
    %c0_i32 = arith.constant 0 : i32
    %c0_i32_0 = arith.constant 0 : i32
    %c0_i32_1 = arith.constant 0 : i32
    return %c0_i32, %c0_i32_0 : i32, i32
  }
  func.func @transform_3(%arg0: i32) -> (i32, i32) {
    %c0_i32 = arith.constant 0 : i32
    %c0_i32_0 = arith.constant 0 : i32
    %c0_i32_1 = arith.constant 0 : i32
    return %c0_i32, %c0_i32_0 : i32, i32
  }
  func.func @transform_4(%arg0: i32) -> (i32, i32) {
    %c0_i32 = arith.constant 0 : i32
    %c0_i32_0 = arith.constant 0 : i32
    %c0_i32_1 = arith.constant 0 : i32
    return %c0_i32, %c0_i32_0 : i32, i32
  }
  func.func @transform_5(%arg0: i32) -> (i32, i32) {
    %c0_i32 = arith.constant 0 : i32
    %c0_i32_0 = arith.constant 0 : i32
    %c0_i32_1 = arith.constant 0 : i32
    return %c0_i32, %c0_i32_0 : i32, i32
  }
  func.func @transform_6(%arg0: i32) -> (i32, i32) {
    %c0_i32 = arith.constant 0 : i32
    %c0_i32_0 = arith.constant 0 : i32
    %c0_i32_1 = arith.constant 0 : i32
    return %c0_i32, %c0_i32_0 : i32, i32
  }
  func.func @transform_7(%arg0: i32) -> (i32, i32) {
    %c0_i32 = arith.constant 0 : i32
    %c0_i32_0 = arith.constant 0 : i32
    return %c0_i32, %arg0 : i32, i32
  }
}

</mosaic_0001>

<llo_original>
// kernel: ncf_forward.1
$region0: #{ncf_forward.1}
  #allocation0 [shape = 'u32[]', space=smem, size = 0x4, offset = 0x4, fixed_abs, tag = 'smem constant byte address 0x4 - core index']
  #allocation1 [shape = 'u32[72,128]{1,0:T(1,128)}', space=vmem, size = 0x9000, scoped, tag = 'internal scratch']
  %s0 = inlined_call_operand.vmem [shape: s32[1,256], index: 0, kind: input, shape index: {}]
  %s1 = inlined_call_operand.vmem [shape: s32[170,1], index: 1, kind: input, shape index: {}]
  %s2 = inlined_call_operand.vmem [shape: bf16[128,170], index: 2, kind: input, shape index: {}]
  %s3 = inlined_call_operand.vmem [shape: bf16[256,128], index: 3, kind: input, shape index: {}]
  %s4 = inlined_call_operand.vmem [shape: bf16[128,256], index: 4, kind: input, shape index: {}]
  %s5 = inlined_call_operand.vmem [shape: bf16[64,128], index: 5, kind: input, shape index: {}]
  %s6 = inlined_call_operand.vmem [shape: f32[513,1], index: 6, kind: input, shape index: {}]
  %s7 = inlined_call_operand.vmem [shape: f32[1,128], index: 7, kind: output, shape index: {}]
  %s8 = sld [smem:[#allocation0]]
  $region38: #{ncf_forward.1} parent=0
    _
  %s10 = ssub.s32 1, %s8
  %s11 = scalar_select 0, %s10, %s8
  // Predicated region
  $region2: #{ncf_forward.1} parent=0 // pred_check
    _
  $region3: #{ncf_forward.1} parent=0 // pred_check_branch
    %13 = sbr.rel (0) target = $region5
  $region4: #{ncf_forward.1} parent=0 // pred_region
    _
  $region5: #{ncf_forward.1} parent=0 // pred_fallthru
    _
  // Predicated region
  $region6: #{ncf_forward.1} parent=0 // pred_check
    _
  $region7: #{ncf_forward.1} parent=0 // pred_check_branch
    %15 = sbr.rel (0) target = $region9
  $region8: #{ncf_forward.1} parent=0 // pred_region
    _
  $region9: #{ncf_forward.1} parent=0 // pred_fallthru
    _
  // Predicated region
  $region10: #{ncf_forward.1} parent=0 // pred_check
    _
  $region11: #{ncf_forward.1} parent=0 // pred_check_branch
    %17 = sbr.rel (0) target = $region13
  $region12: #{ncf_forward.1} parent=0 // pred_region
    _
  $region13: #{ncf_forward.1} parent=0 // pred_fallthru
    _
  // Predicated region
  $region14: #{ncf_forward.1} parent=0 // pred_check
    _
  $region15: #{ncf_forward.1} parent=0 // pred_check_branch
    %19 = sbr.rel (0) target = $region17
  $region16: #{ncf_forward.1} parent=0 // pred_region
    _
  $region17: #{ncf_forward.1} parent=0 // pred_fallthru
    _
  // Predicated region
  $region18: #{ncf_forward.1} parent=0 // pred_check
    _
  $region19: #{ncf_forward.1} parent=0 // pred_check_branch
    %21 = sbr.rel (0) target = $region21
  $region20: #{ncf_forward.1} parent=0 // pred_region
    _
  $region21: #{ncf_forward.1} parent=0 // pred_fallthru
    _
  // Predicated region
  $region22: #{ncf_forward.1} parent=0 // pred_check
    _
  $region23: #{ncf_forward.1} parent=0 // pred_check_branch
    %23 = sbr.rel (0) target = $region25
  $region24: #{ncf_forward.1} parent=0 // pred_region
    _
  $region25: #{ncf_forward.1} parent=0 // pred_fallthru
    _
  // Predicated region
  $region26: #{ncf_forward.1} parent=0 // pred_check
    _
  $region27: #{ncf_forward.1} parent=0 // pred_check_branch
    %25 = sbr.rel (0) target = $region29
  $region28: #{ncf_forward.1} parent=0 // pred_region
    _
  $region29: #{ncf_forward.1} parent=0 // pred_fallthru
    _
  %v27 = vld [vmem:[%s0] sm:$0x3]
  %v28 = vld [vmem:[%s1] sm:$0xff]
  %v29 = vld [vmem:[%s1 + $0x8] sm:$0xff]
  %v30 = vld [vmem:[%s1 + $0x10] sm:$0xff]
  %v31 = vld [vmem:[%s1 + $0x18] sm:$0xff]
  %v32 = vld [vmem:[%s1 + $0x20] sm:$0xff]
  %v33 = vld [vmem:[%s1 + $0x28] sm:$0xff]
  %v34 = vld [vmem:[%s1 + $0x30] sm:$0xff]
  %v35 = vld [vmem:[%s1 + $0x38] sm:$0xff]
  %v36 = vld [vmem:[%s1 + $0x40] sm:$0xff]
  %v37 = vld [vmem:[%s1 + $0x48] sm:$0xff]
  %v38 = vld [vmem:[%s1 + $0x50] sm:$0xff]
  %v39 = vld [vmem:[%s1 + $0x58] sm:$0xff]
  %v40 = vld [vmem:[%s1 + $0x60] sm:$0xff]
  %v41 = vld [vmem:[%s1 + $0x68] sm:$0xff]
  %v42 = vld [vmem:[%s1 + $0x70] sm:$0xff]
  %v43 = vld [vmem:[%s1 + $0x78] sm:$0xff]
  %v44 = vld [vmem:[%s1 + $0x80] sm:$0xff]
  %v45 = vld [vmem:[%s1 + $0x88] sm:$0xff]
  %v46 = vld [vmem:[%s1 + $0x90] sm:$0xff]
  %v47 = vld [vmem:[%s1 + $0x98] sm:$0xff]
  %v48 = vld [vmem:[%s1 + $0xa0] sm:$0xff]
  %v49 = vld [vmem:[%s1 + $0xa8] sm:$0x3]
  %50 = vset.pattern.permute.xlu0 0
  %51 = vperm.xlu0 %50, %v28
  %v52 = vpop.permute.xlu0 %51
  %53 = vset.pattern.permute.xlu0 0
  %54 = vperm.xlu0 %53, %v29
  %v55 = vpop.permute.xlu0 %54
  %56 = vset.pattern.permute.xlu0 0
  %57 = vperm.xlu0 %56, %v30
  %v58 = vpop.permute.xlu0 %57
  %59 = vset.pattern.permute.xlu0 0
  %60 = vperm.xlu0 %59, %v31
  %v61 = vpop.permute.xlu0 %60
  %62 = vset.pattern.permute.xlu0 0
  %63 = vperm.xlu0 %62, %v32
  %v64 = vpop.permute.xlu0 %63
  %65 = vset.pattern.permute.xlu0 0
  %66 = vperm.xlu0 %65, %v33
  %v67 = vpop.permute.xlu0 %66
  %68 = vset.pattern.permute.xlu0 0
  %69 = vperm.xlu0 %68, %v34
  %v70 = vpop.permute.xlu0 %69
  %71 = vset.pattern.permute.xlu0 0
  %72 = vperm.xlu0 %71, %v35
  %v73 = vpop.permute.xlu0 %72
  %74 = vset.pattern.permute.xlu0 0
  %75 = vperm.xlu0 %74, %v36
  %v76 = vpop.permute.xlu0 %75
  %77 = vset.pattern.permute.xlu0 0
  %78 = vperm.xlu0 %77, %v37
  %v79 = vpop.permute.xlu0 %78
  %80 = vset.pattern.permute.xlu0 0
  %81 = vperm.xlu0 %80, %v38
  %v82 = vpop.permute.xlu0 %81
  %83 = vset.pattern.permute.xlu0 0
  %84 = vperm.xlu0 %83, %v39
  %v85 = vpop.permute.xlu0 %84
  %86 = vset.pattern.permute.xlu0 0
  %87 = vperm.xlu0 %86, %v40
  %v88 = vpop.permute.xlu0 %87
  %89 = vset.pattern.permute.xlu0 0
  %90 = vperm.xlu0 %89, %v41
  %v91 = vpop.permute.xlu0 %90
  %92 = vset.pattern.permute.xlu0 0
  %93 = vperm.xlu0 %92, %v42
  %v94 = vpop.permute.xlu0 %93
  %95 = vset.pattern.permute.xlu0 0
  %96 = vperm.xlu0 %95, %v43
  %v97 = vpop.permute.xlu0 %96
  %98 = vset.pattern.permute.xlu0 0
  %99 = vperm.xlu0 %98, %v44
  %v100 = vpop.permute.xlu0 %99
  %101 = vset.pattern.permute.xlu0 0
  %102 = vperm.xlu0 %101, %v45
  %v103 = vpop.permute.xlu0 %102
  %104 = vset.pattern.permute.xlu0 0
  %105 = vperm.xlu0 %104, %v46
  %v106 = vpop.permute.xlu0 %105
  %107 = vset.pattern.permute.xlu0 0
  %108 = vperm.xlu0 %107, %v47
  %v109 = vpop.permute.xlu0 %108
  %110 = vset.pattern.permute.xlu0 0
  %111 = vperm.xlu0 %110, %v48
  %v112 = vpop.permute.xlu0 %111
  %113 = vset.pattern.permute.xlu0 0
  %114 = vperm.xlu0 %113, %v49
  %v115 = vpop.permute.xlu0 %114
  %v116 = vperm.slane %v27, 0
  %v117 = vperm.slane %v27, 1
  %vm118 = vcmp.eq.s32.totalorder %v52, %v116
  %vm119 = vcmp.eq.s32.totalorder %v52, %v117
  %vm120 = vcmp.eq.s32.totalorder %v55, %v116
  %vm121 = vcmp.eq.s32.totalorder %v55, %v117
  %vm122 = vcmp.eq.s32.totalorder %v58, %v116
  %vm123 = vcmp.eq.s32.totalorder %v58, %v117
  %vm124 = vcmp.eq.s32.totalorder %v61, %v116
  %vm125 = vcmp.eq.s32.totalorder %v61, %v117
  %vm126 = vcmp.eq.s32.totalorder %v64, %v116
  %vm127 = vcmp.eq.s32.totalorder %v64, %v117
  %vm128 = vcmp.eq.s32.totalorder %v67, %v116
  %vm129 = vcmp.eq.s32.totalorder %v67, %v117
  %vm130 = vcmp.eq.s32.totalorder %v70, %v116
  %vm131 = vcmp.eq.s32.totalorder %v70, %v117
  %vm132 = vcmp.eq.s32.totalorder %v73, %v116
  %vm133 = vcmp.eq.s32.totalorder %v73, %v117
  %vm134 = vcmp.eq.s32.totalorder %v76, %v116
  %vm135 = vcmp.eq.s32.totalorder %v76, %v117
  %vm136 = vcmp.eq.s32.totalorder %v79, %v116
  %vm137 = vcmp.eq.s32.totalorder %v79, %v117
  %vm138 = vcmp.eq.s32.totalorder %v82, %v116
  %vm139 = vcmp.eq.s32.totalorder %v82, %v117
  %vm140 = vcmp.eq.s32.totalorder %v85, %v116
  %vm141 = vcmp.eq.s32.totalorder %v85, %v117
  %vm142 = vcmp.eq.s32.totalorder %v88, %v116
  %vm143 = vcmp.eq.s32.totalorder %v88, %v117
  %vm144 = vcmp.eq.s32.totalorder %v91, %v116
  %vm145 = vcmp.eq.s32.totalorder %v91, %v117
  %vm146 = vcmp.eq.s32.totalorder %v94, %v116
  %vm147 = vcmp.eq.s32.totalorder %v94, %v117
  %vm148 = vcmp.eq.s32.totalorder %v97, %v116
  %vm149 = vcmp.eq.s32.totalorder %v97, %v117
  %vm150 = vcmp.eq.s32.totalorder %v100, %v116
  %vm151 = vcmp.eq.s32.totalorder %v100, %v117
  %vm152 = vcmp.eq.s32.totalorder %v103, %v116
  %vm153 = vcmp.eq.s32.totalorder %v103, %v117
  %vm154 = vcmp.eq.s32.totalorder %v106, %v116
  %vm155 = vcmp.eq.s32.totalorder %v106, %v117
  %vm156 = vcmp.eq.s32.totalorder %v109, %v116
  %vm157 = vcmp.eq.s32.totalorder %v109, %v117
  %vm158 = vcmp.eq.s32.totalorder %v112, %v116
  %vm159 = vcmp.eq.s32.totalorder %v112, %v117
  %vm160 = vcmp.eq.s32.totalorder %v115, %v116
  %vm161 = vcmp.eq.s32.totalorder %v115, %v117
  %v162 = vsel %vm118, 1, 0
  %v163 = vsel %vm119, 1, 0
  %v164 = vsel %vm120, 1, 0
  %v165 = vsel %vm121, 1, 0
  %v166 = vsel %vm122, 1, 0
  %v167 = vsel %vm123, 1, 0
  %v168 = vsel %vm124, 1, 0
  %v169 = vsel %vm125, 1, 0
  %v170 = vsel %vm126, 1, 0
  %v171 = vsel %vm127, 1, 0
  %v172 = vsel %vm128, 1, 0
  %v173 = vsel %vm129, 1, 0
  %v174 = vsel %vm130, 1, 0
  %v175 = vsel %vm131, 1, 0
  %v176 = vsel %vm132, 1, 0
  %v177 = vsel %vm133, 1, 0
  %v178 = vsel %vm134, 1, 0
  %v179 = vsel %vm135, 1, 0
  %v180 = vsel %vm136, 1, 0
  %v181 = vsel %vm137, 1, 0
  %v182 = vsel %vm138, 1, 0
  %v183 = vsel %vm139, 1, 0
  %v184 = vsel %vm140, 1, 0
  %v185 = vsel %vm141, 1, 0
  %v186 = vsel %vm142, 1, 0
  %v187 = vsel %vm143, 1, 0
  %v188 = vsel %vm144, 1, 0
  %v189 = vsel %vm145, 1, 0
  %v190 = vsel %vm146, 1, 0
  %v191 = vsel %vm147, 1, 0
  %v192 = vsel %vm148, 1, 0
  %v193 = vsel %vm149, 1, 0
  %v194 = vsel %vm150, 1, 0
  %v195 = vsel %vm151, 1, 0
  %v196 = vsel %vm152, 1, 0
  %v197 = vsel %vm153, 1, 0
  %v198 = vsel %vm154, 1, 0
  %v199 = vsel %vm155, 1, 0
  %v200 = vsel %vm156, 1, 0
  %v201 = vsel %vm157, 1, 0
  %v202 = vsel %vm158, 1, 0
  %v203 = vsel %vm159, 1, 0
  %v204 = vsel %vm160, 1, 0
  %v205 = vsel %vm161, 1, 0
  %v206 = vcvt.s32.f32 %v162
  %v207 = vcvt.s32.f32 %v163
  %v208 = vcvt.s32.f32 %v164
  %v209 = vcvt.s32.f32 %v165
  %v210 = vcvt.s32.f32 %v166
  %v211 = vcvt.s32.f32 %v167
  %v212 = vcvt.s32.f32 %v168
  %v213 = vcvt.s32.f32 %v169
  %v214 = vcvt.s32.f32 %v170
  %v215 = vcvt.s32.f32 %v171
  %v216 = vcvt.s32.f32 %v172
  %v217 = vcvt.s32.f32 %v173
  %v218 = vcvt.s32.f32 %v174
  %v219 = vcvt.s32.f32 %v175
  %v220 = vcvt.s32.f32 %v176
  %v221 = vcvt.s32.f32 %v177
  %v222 = vcvt.s32.f32 %v178
  %v223 = vcvt.s32.f32 %v179
  %v224 = vcvt.s32.f32 %v180
  %v225 = vcvt.s32.f32 %v181
  %v226 = vcvt.s32.f32 %v182
  %v227 = vcvt.s32.f32 %v183
  %v228 = vcvt.s32.f32 %v184
  %v229 = vcvt.s32.f32 %v185
  %v230 = vcvt.s32.f32 %v186
  %v231 = vcvt.s32.f32 %v187
  %v232 = vcvt.s32.f32 %v188
  %v233 = vcvt.s32.f32 %v189
  %v234 = vcvt.s32.f32 %v190
  %v235 = vcvt.s32.f32 %v191
  %v236 = vcvt.s32.f32 %v192
  %v237 = vcvt.s32.f32 %v193
  %v238 = vcvt.s32.f32 %v194
  %v239 = vcvt.s32.f32 %v195
  %v240 = vcvt.s32.f32 %v196
  %v241 = vcvt.s32.f32 %v197
  %v242 = vcvt.s32.f32 %v198
  %v243 = vcvt.s32.f32 %v199
  %v244 = vcvt.s32.f32 %v200
  %v245 = vcvt.s32.f32 %v201
  %v246 = vcvt.s32.f32 %v202
  %v247 = vcvt.s32.f32 %v203
  %v248 = vcvt.s32.f32 %v204
  %v249 = vcvt.s32.f32 %v205
  %v250 = vpack.c.bf16 %v208, %v206
  %v251 = vpack.c.bf16 %v209, %v207
  %v252 = vpack.c.bf16 %v212, %v210
  %v253 = vpack.c.bf16 %v213, %v211
  %v254 = vpack.c.bf16 %v216, %v214
  %v255 = vpack.c.bf16 %v217, %v215
  %v256 = vpack.c.bf16 %v220, %v218
  %v257 = vpack.c.bf16 %v221, %v219
  %v258 = vpack.c.bf16 %v224, %v222
  %v259 = vpack.c.bf16 %v225, %v223
  %v260 = vpack.c.bf16 %v228, %v226
  %v261 = vpack.c.bf16 %v229, %v227
  %v262 = vpack.c.bf16 %v232, %v230
  %v263 = vpack.c.bf16 %v233, %v231
  %v264 = vpack.c.bf16 %v236, %v234
  %v265 = vpack.c.bf16 %v237, %v235
  %v266 = vpack.c.bf16 %v240, %v238
  %v267 = vpack.c.bf16 %v241, %v239
  %v268 = vpack.c.bf16 %v244, %v242
  %v269 = vpack.c.bf16 %v245, %v243
  %v270 = vpack.c.bf16 %v248, %v246
  %v271 = vpack.c.bf16 %v249, %v247
  %v272 = vld [vmem:[%s2] sm:$0xff]
  %v273 = vld [vmem:[%s2 + $0x8] sm:$0xff]
  %v274 = vld [vmem:[%s2 + $0x10] sm:$0xff]
  %v275 = vld [vmem:[%s2 + $0x18] sm:$0xff]
  %v276 = vld [vmem:[%s2 + $0x20] sm:$0xff]
  %v277 = vld [vmem:[%s2 + $0x28] sm:$0xff]
  %v278 = vld [vmem:[%s2 + $0x30] sm:$0xff]
  %v279 = vld [vmem:[%s2 + $0x38] sm:$0xff]
  %v280 = vld [vmem:[%s2 + $0x40] sm:$0xff]
  %v281 = vld [vmem:[%s2 + $0x48] sm:$0xff]
  %v282 = vld [vmem:[%s2 + $0x50] sm:$0xff]
  %v283 = vld [vmem:[%s2 + $0x58] sm:$0xff]
  %v284 = vld [vmem:[%s2 + $0x60] sm:$0xff]
  %v285 = vld [vmem:[%s2 + $0x68] sm:$0xff]
  %v286 = vld [vmem:[%s2 + $0x70] sm:$0xff]
  %v287 = vld [vmem:[%s2 + $0x78] sm:$0xff]
  %v304 = vunpack.c.l.b16 %v272
  %v305 = vunpack.c.h.b16 %v272
  %v306 = vunpack.c.l.b16 %v273
  %v307 = vunpack.c.h.b16 %v273
  %v308 = vunpack.c.l.b16 %v274
  %v309 = vunpack.c.h.b16 %v274
  %v310 = vunpack.c.l.b16 %v275
  %v311 = vunpack.c.h.b16 %v275
  %v312 = vunpack.c.l.b16 %v276
  %v313 = vunpack.c.h.b16 %v276
  %v314 = vunpack.c.l.b16 %v277
  %v315 = vunpack.c.h.b16 %v277
  %v316 = vunpack.c.l.b16 %v278
  %v317 = vunpack.c.h.b16 %v278
  %v318 = vunpack.c.l.b16 %v279
  %v319 = vunpack.c.h.b16 %v279
  %v320 = vunpack.c.l.b16 %v280
  %v321 = vunpack.c.h.b16 %v280
  %v322 = vunpack.c.l.b16 %v281
  %v323 = vunpack.c.h.b16 %v281
  %v324 = vunpack.c.l.b16 %v282
  %v325 = vunpack.c.h.b16 %v282
  %v326 = vunpack.c.l.b16 %v283
  %v327 = vunpack.c.h.b16 %v283
  %v328 = vunpack.c.l.b16 %v284
  %v329 = vunpack.c.h.b16 %v284
  %v330 = vunpack.c.l.b16 %v285
  %v331 = vunpack.c.h.b16 %v285
  %v332 = vunpack.c.l.b16 %v286
  %v333 = vunpack.c.h.b16 %v286
  %v334 = vunpack.c.l.b16 %v287
  %v335 = vunpack.c.h.b16 %v287
  %v336 = vpack.c.b16 %v306, %v304
  %v337 = vpack.c.b16 %v307, %v305
  %v338 = vpack.c.b16 %v310, %v308
  %v339 = vpack.c.b16 %v311, %v309
  %v340 = vpack.c.b16 %v314, %v312
  %v341 = vpack.c.b16 %v315, %v313
  %v342 = vpack.c.b16 %v318, %v316
  %v343 = vpack.c.b16 %v319, %v317
  %v344 = vpack.c.b16 %v322, %v320
  %v345 = vpack.c.b16 %v323, %v321
  %v346 = vpack.c.b16 %v326, %v324
  %v347 = vpack.c.b16 %v327, %v325
  %v348 = vpack.c.b16 %v330, %v328
  %v349 = vpack.c.b16 %v331, %v329
  %v350 = vpack.c.b16 %v334, %v332
  %v351 = vpack.c.b16 %v335, %v333
  %vm360 = vcmask 343040
  %v362 = vsel %vm360, %v337, 0
  %v365 = vsel %vm360, %v339, 0
  %v368 = vsel %vm360, %v341, 0
  %v371 = vsel %vm360, %v343, 0
  %v374 = vsel %vm360, %v345, 0
  %v377 = vsel %vm360, %v347, 0
  %v380 = vsel %vm360, %v349, 0
  %v383 = vsel %vm360, %v351, 0
  %vm385 = vcmask 1044480
  %v387 = vsel %vm385, %v270, 0
  %v390 = vsel %vm385, %v271, 0
  %392 = vmatpush.bf16.msra.mxu0 %v264
  %393 = vmatpush.bf16.msra.mxu0 %v262
  %394 = vmatpush.bf16.msra.mxu0 %v260
  %395 = vmatpush.bf16.msra.mxu0 %v258
  %396 = vmatpush.bf16.msra.mxu0 %v256
  %397 = vmatpush.bf16.msra.mxu0 %v254
  %398 = vmatpush.bf16.msra.mxu0 %v252
  %399 = vmatpush.bf16.msra.mxu0 %v250
  %400 = vmatmul.bf16.gmra.mxu0 %v336
  %v401 = vpop.f32.mrf.mxu0
  %v402 = vadd.f32 0.0, %v401
  %v403 = vpop.f32.mrf.mxu0
  %v404 = vadd.f32 0.0, %v403
  %405 = vmatmul.bf16.gmra.mxu0 %v338
  %v406 = vpop.f32.mrf.mxu0
  %v407 = vadd.f32 0.0, %v406
  %v408 = vpop.f32.mrf.mxu0
  %v409 = vadd.f32 0.0, %v408
  %410 = vmatmul.bf16.gmra.mxu0 %v340
  %v411 = vpop.f32.mrf.mxu0
  %v412 = vadd.f32 0.0, %v411
  %v413 = vpop.f32.mrf.mxu0
  %v414 = vadd.f32 0.0, %v413
  %415 = vmatmul.bf16.gmra.mxu0 %v342
  %v416 = vpop.f32.mrf.mxu0
  %v417 = vadd.f32 0.0, %v416
  %v418 = vpop.f32.mrf.mxu0
  %v419 = vadd.f32 0.0, %v418
  %420 = vmatmul.bf16.gmra.mxu0 %v344
  %v421 = vpop.f32.mrf.mxu0
  %v422 = vadd.f32 0.0, %v421
  %v423 = vpop.f32.mrf.mxu0
  %v424 = vadd.f32 0.0, %v423
  %425 = vmatmul.bf16.gmra.mxu0 %v346
  %v426 = vpop.f32.mrf.mxu0
  %v427 = vadd.f32 0.0, %v426
  %v428 = vpop.f32.mrf.mxu0
  %v429 = vadd.f32 0.0, %v428
  %430 = vmatmul.bf16.gmra.mxu0 %v348
  %v431 = vpop.f32.mrf.mxu0
  %v432 = vadd.f32 0.0, %v431
  %v433 = vpop.f32.mrf.mxu0
  %v434 = vadd.f32 0.0, %v433
  %435 = vmatmul.bf16.gmra.mxu0 %v350
  %v436 = vpop.f32.mrf.mxu0
  %v437 = vadd.f32 0.0, %v436
  %v438 = vpop.f32.mrf.mxu0
  %v439 = vadd.f32 0.0, %v438
  %440 = vdwg.mxu0
  %441 = vmatpush.bf16.msra.mxu0 0
  %442 = vmatpush.bf16.msra.mxu0 0
  %443 = vmatpush.bf16.msra.mxu0 0
  %444 = vmatpush.bf16.msra.mxu0 0
  %445 = vmatpush.bf16.msra.mxu0 0
  %446 = vmatpush.bf16.msra.mxu0 %v387
  %447 = vmatpush.bf16.msra.mxu0 %v268
  %448 = vmatpush.bf16.msra.mxu0 %v266
  %449 = vmatmul.bf16.gmra.mxu0 %v362
  %v450 = vpop.f32.mrf.mxu0
  %v451 = vadd.f32 %v402, %v450
  %v452 = vpop.f32.mrf.mxu0
  %v453 = vadd.f32 %v404, %v452
  %454 = vmatmul.bf16.gmra.mxu0 %v365
  %v455 = vpop.f32.mrf.mxu0
  %v456 = vadd.f32 %v407, %v455
  %v457 = vpop.f32.mrf.mxu0
  %v458 = vadd.f32 %v409, %v457
  %459 = vmatmul.bf16.gmra.mxu0 %v368
  %v460 = vpop.f32.mrf.mxu0
  %v461 = vadd.f32 %v412, %v460
  %v462 = vpop.f32.mrf.mxu0
  %v463 = vadd.f32 %v414, %v462
  %464 = vmatmul.bf16.gmra.mxu0 %v371
  %v465 = vpop.f32.mrf.mxu0
  %v466 = vadd.f32 %v417, %v465
  %v467 = vpop.f32.mrf.mxu0
  %v468 = vadd.f32 %v419, %v467
  %469 = vmatmul.bf16.gmra.mxu0 %v374
  %v470 = vpop.f32.mrf.mxu0
  %v471 = vadd.f32 %v422, %v470
  %v472 = vpop.f32.mrf.mxu0
  %v473 = vadd.f32 %v424, %v472
  %474 = vmatmul.bf16.gmra.mxu0 %v377
  %v475 = vpop.f32.mrf.mxu0
  %v476 = vadd.f32 %v427, %v475
  %v477 = vpop.f32.mrf.mxu0
  %v478 = vadd.f32 %v429, %v477
  %479 = vmatmul.bf16.gmra.mxu0 %v380
  %v480 = vpop.f32.mrf.mxu0
  %v481 = vadd.f32 %v432, %v480
  %v482 = vpop.f32.mrf.mxu0
  %v483 = vadd.f32 %v434, %v482
  %484 = vmatmul.bf16.gmra.mxu0 %v383
  %v485 = vpop.f32.mrf.mxu0
  %v486 = vadd.f32 %v437, %v485
  %v487 = vpop.f32.mrf.mxu0
  %v488 = vadd.f32 %v439, %v487
  %489 = vdwg.mxu0
  %490 = vmatpush.bf16.msra.mxu0 %v265
  %491 = vmatpush.bf16.msra.mxu0 %v263
  %492 = vmatpush.bf16.msra.mxu0 %v261
  %493 = vmatpush.bf16.msra.mxu0 %v259
  %494 = vmatpush.bf16.msra.mxu0 %v257
  %495 = vmatpush.bf16.msra.mxu0 %v255
  %496 = vmatpush.bf16.msra.mxu0 %v253
  %497 = vmatpush.bf16.msra.mxu0 %v251
  %498 = vmatmul.bf16.gmra.mxu0 %v336
  %v499 = vpop.f32.mrf.mxu0
  %v500 = vadd.f32 0.0, %v499
  %v501 = vpop.f32.mrf.mxu0
  %v502 = vadd.f32 0.0, %v501
  %503 = vmatmul.bf16.gmra.mxu0 %v338
  %v504 = vpop.f32.mrf.mxu0
  %v505 = vadd.f32 0.0, %v504
  %v506 = vpop.f32.mrf.mxu0
  %v507 = vadd.f32 0.0, %v506
  %508 = vmatmul.bf16.gmra.mxu0 %v340
  %v509 = vpop.f32.mrf.mxu0
  %v510 = vadd.f32 0.0, %v509
  %v511 = vpop.f32.mrf.mxu0
  %v512 = vadd.f32 0.0, %v511
  %513 = vmatmul.bf16.gmra.mxu0 %v342
  %v514 = vpop.f32.mrf.mxu0
  %v515 = vadd.f32 0.0, %v514
  %v516 = vpop.f32.mrf.mxu0
  %v517 = vadd.f32 0.0, %v516
  %518 = vmatmul.bf16.gmra.mxu0 %v344
  %v519 = vpop.f32.mrf.mxu0
  %v520 = vadd.f32 0.0, %v519
  %v521 = vpop.f32.mrf.mxu0
  %v522 = vadd.f32 0.0, %v521
  %523 = vmatmul.bf16.gmra.mxu0 %v346
  %v524 = vpop.f32.mrf.mxu0
  %v525 = vadd.f32 0.0, %v524
  %v526 = vpop.f32.mrf.mxu0
  %v527 = vadd.f32 0.0, %v526
  %528 = vmatmul.bf16.gmra.mxu0 %v348
  %v529 = vpop.f32.mrf.mxu0
  %v530 = vadd.f32 0.0, %v529
  %v531 = vpop.f32.mrf.mxu0
  %v532 = vadd.f32 0.0, %v531
  %533 = vmatmul.bf16.gmra.mxu0 %v350
  %v534 = vpop.f32.mrf.mxu0
  %v535 = vadd.f32 0.0, %v534
  %v536 = vpop.f32.mrf.mxu0
  %v537 = vadd.f32 0.0, %v536
  %538 = vdwg.mxu0
  %539 = vmatpush.bf16.msra.mxu0 0
  %540 = vmatpush.bf16.msra.mxu0 0
  %541 = vmatpush.bf16.msra.mxu0 0
  %542 = vmatpush.bf16.msra.mxu0 0
  %543 = vmatpush.bf16.msra.mxu0 0
  %544 = vmatpush.bf16.msra.mxu0 %v390
  %545 = vmatpush.bf16.msra.mxu0 %v269
  %546 = vmatpush.bf16.msra.mxu0 %v267
  %547 = vmatmul.bf16.gmra.mxu0 %v362
  %v548 = vpop.f32.mrf.mxu0
  %v549 = vadd.f32 %v500, %v548
  %v550 = vpop.f32.mrf.mxu0
  %v551 = vadd.f32 %v502, %v550
  %552 = vmatmul.bf16.gmra.mxu0 %v365
  %v553 = vpop.f32.mrf.mxu0
  %v554 = vadd.f32 %v505, %v553
  %v555 = vpop.f32.mrf.mxu0
  %v556 = vadd.f32 %v507, %v555
  %557 = vmatmul.bf16.gmra.mxu0 %v368
  %v558 = vpop.f32.mrf.mxu0
  %v559 = vadd.f32 %v510, %v558
  %v560 = vpop.f32.mrf.mxu0
  %v561 = vadd.f32 %v512, %v560
  %562 = vmatmul.bf16.gmra.mxu0 %v371
  %v563 = vpop.f32.mrf.mxu0
  %v564 = vadd.f32 %v515, %v563
  %v565 = vpop.f32.mrf.mxu0
  %v566 = vadd.f32 %v517, %v565
  %567 = vmatmul.bf16.gmra.mxu0 %v374
  %v568 = vpop.f32.mrf.mxu0
  %v569 = vadd.f32 %v520, %v568
  %v570 = vpop.f32.mrf.mxu0
  %v571 = vadd.f32 %v522, %v570
  %572 = vmatmul.bf16.gmra.mxu0 %v377
  %v573 = vpop.f32.mrf.mxu0
  %v574 = vadd.f32 %v525, %v573
  %v575 = vpop.f32.mrf.mxu0
  %v576 = vadd.f32 %v527, %v575
  %577 = vmatmul.bf16.gmra.mxu0 %v380
  %v578 = vpop.f32.mrf.mxu0
  %v579 = vadd.f32 %v530, %v578
  %v580 = vpop.f32.mrf.mxu0
  %v581 = vadd.f32 %v532, %v580
  %582 = vmatmul.bf16.gmra.mxu0 %v383
  %v583 = vpop.f32.mrf.mxu0
  %v584 = vadd.f32 %v535, %v583
  %v585 = vpop.f32.mrf.mxu0
  %v586 = vadd.f32 %v537, %v585
  %587 = vdwg.mxu0
  %v588 = vmul.f32 %v451, %v549
  %v589 = vmul.f32 %v453, %v551
  %v590 = vmul.f32 %v456, %v554
  %v591 = vmul.f32 %v458, %v556
  %v592 = vmul.f32 %v461, %v559
  %v593 = vmul.f32 %v463, %v561
  %v594 = vmul.f32 %v466, %v564
  %v595 = vmul.f32 %v468, %v566
  %v596 = vadd.f32 %v588, %v589
  %v597 = vadd.f32 %v596, %v590
  %v598 = vadd.f32 %v597, %v591
  %v599 = vadd.f32 %v598, %v592
  %v600 = vadd.f32 %v599, %v593
  %v601 = vadd.f32 %v600, %v594
  %v602 = vadd.f32 %v601, %v595
  %v603 = vrot.slane %v602, 4
  %v604 = vadd.f32 %v602, %v603
  %v605 = vrot.slane %v604, 2
  %v606 = vadd.f32 %v604, %v605
  %v607 = vrot.slane %v606, 1
  %v608 = vadd.f32 %v606, %v607
  %v609 = vpack.c.bf16 %v471, %v471
  %v610 = vpack.c.bf16 %v473, %v473
  %v611 = vpack.c.bf16 %v476, %v476
  %v612 = vpack.c.bf16 %v478, %v478
  %v613 = vpack.c.bf16 %v481, %v481
  %v614 = vpack.c.bf16 %v483, %v483
  %v615 = vpack.c.bf16 %v486, %v486
  %v616 = vpack.c.bf16 %v488, %v488
  %v617 = vpack.c.bf16 %v569, %v569
  %v618 = vpack.c.bf16 %v571, %v571
  %v619 = vpack.c.bf16 %v574, %v574
  %v620 = vpack.c.bf16 %v576, %v576
  %v621 = vpack.c.bf16 %v579, %v579
  %v622 = vpack.c.bf16 %v581, %v581
  %v623 = vpack.c.bf16 %v584, %v584
  %v624 = vpack.c.bf16 %v586, %v586
  %v633 = vunpack.c.l.b16 %v609
  %v634 = vunpack.c.l.b16 %v610
  %v635 = vunpack.c.l.b16 %v611
  %v636 = vunpack.c.l.b16 %v612
  %v637 = vunpack.c.l.b16 %v613
  %v638 = vunpack.c.l.b16 %v614
  %v639 = vunpack.c.l.b16 %v615
  %v640 = vunpack.c.l.b16 %v616
  %v641 = vpack.c.b16 %v634, %v633
  %v642 = vpack.c.b16 %v636, %v635
  %v643 = vpack.c.b16 %v638, %v637
  %v644 = vpack.c.b16 %v640, %v639
  %v657 = vunpack.c.l.b16 %v617
  %v658 = vunpack.c.l.b16 %v618
  %v659 = vunpack.c.l.b16 %v619
  %v660 = vunpack.c.l.b16 %v620
  %v661 = vunpack.c.l.b16 %v621
  %v662 = vunpack.c.l.b16 %v622
  %v663 = vunpack.c.l.b16 %v623
  %v664 = vunpack.c.l.b16 %v624
  %v665 = vpack.c.b16 %v658, %v657
  %v666 = vpack.c.b16 %v660, %v659
  %v667 = vpack.c.b16 %v662, %v661
  %v668 = vpack.c.b16 %v664, %v663
  %v673 = vld [vmem:[%s6] sm:$0xff]
  %v674 = vld [vmem:[%s6 + $0x8] sm:$0xff]
  %v675 = vld [vmem:[%s6 + $0x10] sm:$0xff]
  %v676 = vld [vmem:[%s6 + $0x18] sm:$0xff]
  %v677 = vld [vmem:[%s6 + $0x20] sm:$0xff]
  %v678 = vld [vmem:[%s6 + $0x28] sm:$0xff]
  %v679 = vld [vmem:[%s6 + $0x30] sm:$0xff]
  %v680 = vld [vmem:[%s6 + $0x38] sm:$0xff]
  %v681 = vld [vmem:[%s6 + $0x40] sm:$0xff]
  %v682 = vld [vmem:[%s6 + $0x48] sm:$0xff]
  %v683 = vld [vmem:[%s6 + $0x50] sm:$0xff]
  %v684 = vld [vmem:[%s6 + $0x58] sm:$0xff]
  %v685 = vld [vmem:[%s6 + $0x60] sm:$0xff]
  %v686 = vld [vmem:[%s6 + $0x68] sm:$0xff]
  %v687 = vld [vmem:[%s6 + $0x70] sm:$0xff]
  %v688 = vld [vmem:[%s6 + $0x78] sm:$0xff]
  %v689 = vld [vmem:[%s6 + $0x80] sm:$0xff]
  %v690 = vld [vmem:[%s6 + $0x88] sm:$0xff]
  %v691 = vld [vmem:[%s6 + $0x90] sm:$0xff]
  %v692 = vld [vmem:[%s6 + $0x98] sm:$0xff]
  %v693 = vld [vmem:[%s6 + $0xa0] sm:$0xff]
  %v694 = vld [vmem:[%s6 + $0xa8] sm:$0xff]
  %v695 = vld [vmem:[%s6 + $0xb0] sm:$0xff]
  %v696 = vld [vmem:[%s6 + $0xb8] sm:$0xff]
  %v697 = vld [vmem:[%s6 + $0xc0] sm:$0xff]
  %v698 = vld [vmem:[%s6 + $0xc8] sm:$0xff]
  %v699 = vld [vmem:[%s6 + $0xd0] sm:$0xff]
  %v700 = vld [vmem:[%s6 + $0xd8] sm:$0xff]
  %v701 = vld [vmem:[%s6 + $0xe0] sm:$0xff]
  %v702 = vld [vmem:[%s6 + $0xe8] sm:$0xff]
  %v703 = vld [vmem:[%s6 + $0xf0] sm:$0xff]
  %v704 = vld [vmem:[%s6 + $0xf8] sm:$0xff]
  %v705 = vld [vmem:[%s6 + $0x100] sm:$0xff]
  %v706 = vld [vmem:[%s6 + $0x108] sm:$0xff]
  %v707 = vld [vmem:[%s6 + $0x110] sm:$0xff]
  %v708 = vld [vmem:[%s6 + $0x118] sm:$0xff]
  %v709 = vld [vmem:[%s6 + $0x120] sm:$0xff]
  %v710 = vld [vmem:[%s6 + $0x128] sm:$0xff]
  %v711 = vld [vmem:[%s6 + $0x130] sm:$0xff]
  %v712 = vld [vmem:[%s6 + $0x138] sm:$0xff]
  %v713 = vld [vmem:[%s6 + $0x140] sm:$0xff]
  %v714 = vld [vmem:[%s6 + $0x148] sm:$0xff]
  %v715 = vld [vmem:[%s6 + $0x150] sm:$0xff]
  %v716 = vld [vmem:[%s6 + $0x158] sm:$0xff]
  %v717 = vld [vmem:[%s6 + $0x160] sm:$0xff]
  %v718 = vld [vmem:[%s6 + $0x168] sm:$0xff]
  %v719 = vld [vmem:[%s6 + $0x170] sm:$0xff]
  %v720 = vld [vmem:[%s6 + $0x178] sm:$0xff]
  %v721 = vld [vmem:[%s6 + $0x180] sm:$0xff]
  %v722 = vld [vmem:[%s6 + $0x188] sm:$0xff]
  %v723 = vld [vmem:[%s6 + $0x190] sm:$0xff]
  %v724 = vld [vmem:[%s6 + $0x198] sm:$0xff]
  %v725 = vld [vmem:[%s6 + $0x1a0] sm:$0xff]
  %v726 = vld [vmem:[%s6 + $0x1a8] sm:$0xff]
  %v727 = vld [vmem:[%s6 + $0x1b0] sm:$0xff]
  %v728 = vld [vmem:[%s6 + $0x1b8] sm:$0xff]
  %v729 = vld [vmem:[%s6 + $0x1c0] sm:$0xff]
  %v730 = vld [vmem:[%s6 + $0x1c8] sm:$0xff]
  %v731 = vld [vmem:[%s6 + $0x1d0] sm:$0xff]
  %v732 = vld [vmem:[%s6 + $0x1d8] sm:$0xff]
  %v733 = vld [vmem:[%s6 + $0x1e0] sm:$0xff]
  %v734 = vld [vmem:[%s6 + $0x1e8] sm:$0xff]
  %v735 = vld [vmem:[%s6 + $0x1f0] sm:$0xff]
  %v736 = vld [vmem:[%s6 + $0x1f8] sm:$0xff]
  %v737 = vld [vmem:[%s6 + $0x200] sm:$0x1]
  %v738 = vld [vmem:[%s3] sm:$0xf]
  %v739 = vld [vmem:[%s3 + $0x4] sm:$0xf]
  %v740 = vld [vmem:[%s3 + $0x8] sm:$0xf]
  %v741 = vld [vmem:[%s3 + $0xc] sm:$0xf]
  %v742 = vld [vmem:[%s3 + $0x10] sm:$0xf]
  %v743 = vld [vmem:[%s3 + $0x14] sm:$0xf]
  %v744 = vld [vmem:[%s3 + $0x18] sm:$0xf]
  %v745 = vld [vmem:[%s3 + $0x1c] sm:$0xf]
  %v746 = vld [vmem:[%s3 + $0x20] sm:$0xf]
  %v747 = vld [vmem:[%s3 + $0x24] sm:$0xf]
  %v748 = vld [vmem:[%s3 + $0x28] sm:$0xf]
  %v749 = vld [vmem:[%s3 + $0x2c] sm:$0xf]
  %v750 = vld [vmem:[%s3 + $0x30] sm:$0xf]
  %v751 = vld [vmem:[%s3 + $0x34] sm:$0xf]
  %v752 = vld [vmem:[%s3 + $0x38] sm:$0xf]
  %v753 = vld [vmem:[%s3 + $0x3c] sm:$0xf]
  %v754 = vld [vmem:[%s3 + $0x40] sm:$0xf]
  %v755 = vld [vmem:[%s3 + $0x44] sm:$0xf]
  %v756 = vld [vmem:[%s3 + $0x48] sm:$0xf]
  %v757 = vld [vmem:[%s3 + $0x4c] sm:$0xf]
  %v758 = vld [vmem:[%s3 + $0x50] sm:$0xf]
  %v759 = vld [vmem:[%s3 + $0x54] sm:$0xf]
  %v760 = vld [vmem:[%s3 + $0x58] sm:$0xf]
  %v761 = vld [vmem:[%s3 + $0x5c] sm:$0xf]
  %v762 = vld [vmem:[%s3 + $0x60] sm:$0xf]
  %v763 = vld [vmem:[%s3 + $0x64] sm:$0xf]
  %v764 = vld [vmem:[%s3 + $0x68] sm:$0xf]
  %v765 = vld [vmem:[%s3 + $0x6c] sm:$0xf]
  %v766 = vld [vmem:[%s3 + $0x70] sm:$0xf]
  %v767 = vld [vmem:[%s3 + $0x74] sm:$0xf]
  %v768 = vld [vmem:[%s3 + $0x78] sm:$0xf]
  %v769 = vld [vmem:[%s3 + $0x7c] sm:$0xf]
  %771 = vset.pattern.permute.xlu0 0
  %772 = vperm.xlu0 %771, %v673
  %v773 = vpop.permute.xlu0 %772
  %776 = vset.pattern.permute.xlu0 0
  %777 = vperm.xlu0 %776, %v674
  %v778 = vpop.permute.xlu0 %777
  %781 = vset.pattern.permute.xlu0 0
  %782 = vperm.xlu0 %781, %v675
  %v783 = vpop.permute.xlu0 %782
  %786 = vset.pattern.permute.xlu0 0
  %787 = vperm.xlu0 %786, %v676
  %v788 = vpop.permute.xlu0 %787
  %791 = vset.pattern.permute.xlu0 0
  %792 = vperm.xlu0 %791, %v677
  %v793 = vpop.permute.xlu0 %792
  %796 = vset.pattern.permute.xlu0 0
  %797 = vperm.xlu0 %796, %v678
  %v798 = vpop.permute.xlu0 %797
  %801 = vset.pattern.permute.xlu0 0
  %802 = vperm.xlu0 %801, %v679
  %v803 = vpop.permute.xlu0 %802
  %806 = vset.pattern.permute.xlu0 0
  %807 = vperm.xlu0 %806, %v680
  %v808 = vpop.permute.xlu0 %807
  %811 = vset.pattern.permute.xlu0 0
  %812 = vperm.xlu0 %811, %v681
  %v813 = vpop.permute.xlu0 %812
  %816 = vset.pattern.permute.xlu0 0
  %817 = vperm.xlu0 %816, %v682
  %v818 = vpop.permute.xlu0 %817
  %821 = vset.pattern.permute.xlu0 0
  %822 = vperm.xlu0 %821, %v683
  %v823 = vpop.permute.xlu0 %822
  %826 = vset.pattern.permute.xlu0 0
  %827 = vperm.xlu0 %826, %v684
  %v828 = vpop.permute.xlu0 %827
  %831 = vset.pattern.permute.xlu0 0
  %832 = vperm.xlu0 %831, %v685
  %v833 = vpop.permute.xlu0 %832
  %836 = vset.pattern.permute.xlu0 0
  %837 = vperm.xlu0 %836, %v686
  %v838 = vpop.permute.xlu0 %837
  %841 = vset.pattern.permute.xlu0 0
  %842 = vperm.xlu0 %841, %v687
  %v843 = vpop.permute.xlu0 %842
  %846 = vset.pattern.permute.xlu0 0
  %847 = vperm.xlu0 %846, %v688
  %v848 = vpop.permute.xlu0 %847
  %851 = vset.pattern.permute.xlu0 0
  %852 = vperm.xlu0 %851, %v689
  %v853 = vpop.permute.xlu0 %852
  %856 = vset.pattern.permute.xlu0 0
  %857 = vperm.xlu0 %856, %v690
  %v858 = vpop.permute.xlu0 %857
  %861 = vset.pattern.permute.xlu0 0
  %862 = vperm.xlu0 %861, %v691
  %v863 = vpop.permute.xlu0 %862
  %866 = vset.pattern.permute.xlu0 0
  %867 = vperm.xlu0 %866, %v692
  %v868 = vpop.permute.xlu0 %867
  %871 = vset.pattern.permute.xlu0 0
  %872 = vperm.xlu0 %871, %v693
  %v873 = vpop.permute.xlu0 %872
  %876 = vset.pattern.permute.xlu0 0
  %877 = vperm.xlu0 %876, %v694
  %v878 = vpop.permute.xlu0 %877
  %881 = vset.pattern.permute.xlu0 0
  %882 = vperm.xlu0 %881, %v695
  %v883 = vpop.permute.xlu0 %882
  %886 = vset.pattern.permute.xlu0 0
  %887 = vperm.xlu0 %886, %v696
  %v888 = vpop.permute.xlu0 %887
  %891 = vset.pattern.permute.xlu0 0
  %892 = vperm.xlu0 %891, %v697
  %v893 = vpop.permute.xlu0 %892
  %896 = vset.pattern.permute.xlu0 0
  %897 = vperm.xlu0 %896, %v698
  %v898 = vpop.permute.xlu0 %897
  %901 = vset.pattern.permute.xlu0 0
  %902 = vperm.xlu0 %901, %v699
  %v903 = vpop.permute.xlu0 %902
  %906 = vset.pattern.permute.xlu0 0
  %907 = vperm.xlu0 %906, %v700
  %v908 = vpop.permute.xlu0 %907
  %911 = vset.pattern.permute.xlu0 0
  %912 = vperm.xlu0 %911, %v701
  %v913 = vpop.permute.xlu0 %912
  %916 = vset.pattern.permute.xlu0 0
  %917 = vperm.xlu0 %916, %v702
  %v918 = vpop.permute.xlu0 %917
  %921 = vset.pattern.permute.xlu0 0
  %922 = vperm.xlu0 %921, %v703
  %v923 = vpop.permute.xlu0 %922
  %926 = vset.pattern.permute.xlu0 0
  %927 = vperm.xlu0 %926, %v704
  %v928 = vpop.permute.xlu0 %927
  %v962 = vunpack.c.l.b16 %v738
  %v963 = vunpack.c.l.b16 %v739
  %v964 = vunpack.c.l.b16 %v740
  %v965 = vunpack.c.l.b16 %v741
  %v966 = vunpack.c.l.b16 %v742
  %v967 = vunpack.c.l.b16 %v743
  %v968 = vunpack.c.l.b16 %v744
  %v969 = vunpack.c.l.b16 %v745
  %v970 = vunpack.c.l.b16 %v746
  %v971 = vunpack.c.l.b16 %v747
  %v972 = vunpack.c.l.b16 %v748
  %v973 = vunpack.c.l.b16 %v749
  %v974 = vunpack.c.l.b16 %v750
  %v975 = vunpack.c.l.b16 %v751
  %v976 = vunpack.c.l.b16 %v752
  %v977 = vunpack.c.l.b16 %v753
  %v978 = vunpack.c.l.b16 %v754
  %v979 = vunpack.c.l.b16 %v755
  %v980 = vunpack.c.l.b16 %v756
  %v981 = vunpack.c.l.b16 %v757
  %v982 = vunpack.c.l.b16 %v758
  %v983 = vunpack.c.l.b16 %v759
  %v984 = vunpack.c.l.b16 %v760
  %v985 = vunpack.c.l.b16 %v761
  %v986 = vunpack.c.l.b16 %v762
  %v987 = vunpack.c.l.b16 %v763
  %v988 = vunpack.c.l.b16 %v764
  %v989 = vunpack.c.l.b16 %v765
  %v990 = vunpack.c.l.b16 %v766
  %v991 = vunpack.c.l.b16 %v767
  %v992 = vunpack.c.l.b16 %v768
  %v993 = vunpack.c.l.b16 %v769
  %v994 = vpack.c.b16 %v963, %v962
  %v995 = vpack.c.b16 %v965, %v964
  %v996 = vpack.c.b16 %v967, %v966
  %v997 = vpack.c.b16 %v969, %v968
  %v998 = vpack.c.b16 %v971, %v970
  %v999 = vpack.c.b16 %v973, %v972
  %v1000 = vpack.c.b16 %v975, %v974
  %v1001 = vpack.c.b16 %v977, %v976
  %v1002 = vpack.c.b16 %v979, %v978
  %v1003 = vpack.c.b16 %v981, %v980
  %v1004 = vpack.c.b16 %v983, %v982
  %v1005 = vpack.c.b16 %v985, %v984
  %v1006 = vpack.c.b16 %v987, %v986
  %v1007 = vpack.c.b16 %v989, %v988
  %v1008 = vpack.c.b16 %v991, %v990
  %v1009 = vpack.c.b16 %v993, %v992
  %1026 = vmatpush.bf16.msra.mxu0 %v668
  %1027 = vmatpush.bf16.msra.mxu0 %v667
  %1028 = vmatpush.bf16.msra.mxu0 %v666
  %1029 = vmatpush.bf16.msra.mxu0 %v665
  %1030 = vmatpush.bf16.msra.mxu0 %v644
  %1031 = vmatpush.bf16.msra.mxu0 %v643
  %1032 = vmatpush.bf16.msra.mxu0 %v642
  %1033 = vmatpush.bf16.msra.mxu0 %v641
  %1034 = vmatmul.bf16.gmra.mxu0 %v994
  %v1035 = vpop.f32.mrf.mxu0
  %v1036 = vadd.f32 %v773, %v1035
  %v1037 = vpop.f32.mrf.mxu0
  %v1038 = vadd.f32 %v778, %v1037
  %1039 = vmatmul.bf16.gmra.mxu0 %v995
  %v1040 = vpop.f32.mrf.mxu0
  %v1041 = vadd.f32 %v783, %v1040
  %v1042 = vpop.f32.mrf.mxu0
  %v1043 = vadd.f32 %v788, %v1042
  %1044 = vmatmul.bf16.gmra.mxu0 %v996
  %v1045 = vpop.f32.mrf.mxu0
  %v1046 = vadd.f32 %v793, %v1045
  %v1047 = vpop.f32.mrf.mxu0
  %v1048 = vadd.f32 %v798, %v1047
  %1049 = vmatmul.bf16.gmra.mxu0 %v997
  %v1050 = vpop.f32.mrf.mxu0
  %v1051 = vadd.f32 %v803, %v1050
  %v1052 = vpop.f32.mrf.mxu0
  %v1053 = vadd.f32 %v808, %v1052
  %1054 = vmatmul.bf16.gmra.mxu0 %v998
  %v1055 = vpop.f32.mrf.mxu0
  %v1056 = vadd.f32 %v813, %v1055
  %v1057 = vpop.f32.mrf.mxu0
  %v1058 = vadd.f32 %v818, %v1057
  %1059 = vmatmul.bf16.gmra.mxu0 %v999
  %v1060 = vpop.f32.mrf.mxu0
  %v1061 = vadd.f32 %v823, %v1060
  %v1062 = vpop.f32.mrf.mxu0
  %v1063 = vadd.f32 %v828, %v1062
  %1064 = vmatmul.bf16.gmra.mxu0 %v1000
  %v1065 = vpop.f32.mrf.mxu0
  %v1066 = vadd.f32 %v833, %v1065
  %v1067 = vpop.f32.mrf.mxu0
  %v1068 = vadd.f32 %v838, %v1067
  %1069 = vmatmul.bf16.gmra.mxu0 %v1001
  %v1070 = vpop.f32.mrf.mxu0
  %v1071 = vadd.f32 %v843, %v1070
  %v1072 = vpop.f32.mrf.mxu0
  %v1073 = vadd.f32 %v848, %v1072
  %1074 = vmatmul.bf16.gmra.mxu0 %v1002
  %v1075 = vpop.f32.mrf.mxu0
  %v1076 = vadd.f32 %v853, %v1075
  %v1077 = vpop.f32.mrf.mxu0
  %v1078 = vadd.f32 %v858, %v1077
  %1079 = vmatmul.bf16.gmra.mxu0 %v1003
  %v1080 = vpop.f32.mrf.mxu0
  %v1081 = vadd.f32 %v863, %v1080
  %v1082 = vpop.f32.mrf.mxu0
  %v1083 = vadd.f32 %v868, %v1082
  %1084 = vmatmul.bf16.gmra.mxu0 %v1004
  %v1085 = vpop.f32.mrf.mxu0
  %v1086 = vadd.f32 %v873, %v1085
  %v1087 = vpop.f32.mrf.mxu0
  %v1088 = vadd.f32 %v878, %v1087
  %1089 = vmatmul.bf16.gmra.mxu0 %v1005
  %v1090 = vpop.f32.mrf.mxu0
  %v1091 = vadd.f32 %v883, %v1090
  %v1092 = vpop.f32.mrf.mxu0
  %v1093 = vadd.f32 %v888, %v1092
  %1094 = vmatmul.bf16.gmra.mxu0 %v1006
  %v1095 = vpop.f32.mrf.mxu0
  %v1096 = vadd.f32 %v893, %v1095
  %v1097 = vpop.f32.mrf.mxu0
  %v1098 = vadd.f32 %v898, %v1097
  %1099 = vmatmul.bf16.gmra.mxu0 %v1007
  %v1100 = vpop.f32.mrf.mxu0
  %v1101 = vadd.f32 %v903, %v1100
  %v1102 = vpop.f32.mrf.mxu0
  %v1103 = vadd.f32 %v908, %v1102
  %1104 = vmatmul.bf16.gmra.mxu0 %v1008
  %v1105 = vpop.f32.mrf.mxu0
  %v1106 = vadd.f32 %v913, %v1105
  %v1107 = vpop.f32.mrf.mxu0
  %v1108 = vadd.f32 %v918, %v1107
  %1109 = vmatmul.bf16.gmra.mxu0 %v1009
  %v1110 = vpop.f32.mrf.mxu0
  %v1111 = vadd.f32 %v923, %v1110
  %v1112 = vpop.f32.mrf.mxu0
  %v1113 = vadd.f32 %v928, %v1112
  %1114 = vdwg.mxu0
  %v1115 = vmax.f32 %v1036, 0.0
  %v1116 = vmax.f32 %v1038, 0.0
  %v1117 = vmax.f32 %v1041, 0.0
  %v1118 = vmax.f32 %v1043, 0.0
  %v1119 = vmax.f32 %v1046, 0.0
  %v1120 = vmax.f32 %v1048, 0.0
  %v1121 = vmax.f32 %v1051, 0.0
  %v1122 = vmax.f32 %v1053, 0.0
  %v1123 = vmax.f32 %v1056, 0.0
  %v1124 = vmax.f32 %v1058, 0.0
  %v1125 = vmax.f32 %v1061, 0.0
  %v1126 = vmax.f32 %v1063, 0.0
  %v1127 = vmax.f32 %v1066, 0.0
  %v1128 = vmax.f32 %v1068, 0.0
  %v1129 = vmax.f32 %v1071, 0.0
  %v1130 = vmax.f32 %v1073, 0.0
  %v1131 = vmax.f32 %v1076, 0.0
  %v1132 = vmax.f32 %v1078, 0.0
  %v1133 = vmax.f32 %v1081, 0.0
  %v1134 = vmax.f32 %v1083, 0.0
  %v1135 = vmax.f32 %v1086, 0.0
  %v1136 = vmax.f32 %v1088, 0.0
  %v1137 = vmax.f32 %v1091, 0.0
  %v1138 = vmax.f32 %v1093, 0.0
  %v1139 = vmax.f32 %v1096, 0.0
  %v1140 = vmax.f32 %v1098, 0.0
  %v1141 = vmax.f32 %v1101, 0.0
  %v1142 = vmax.f32 %v1103, 0.0
  %v1143 = vmax.f32 %v1106, 0.0
  %v1144 = vmax.f32 %v1108, 0.0
  %v1145 = vmax.f32 %v1111, 0.0
  %v1146 = vmax.f32 %v1113, 0.0
  %v1147 = vld [vmem:[%s4] sm:$0xff]
  %v1148 = vld [vmem:[%s4 + $0x8] sm:$0xff]
  %v1149 = vld [vmem:[%s4 + $0x10] sm:$0xff]
  %v1150 = vld [vmem:[%s4 + $0x18] sm:$0xff]
  %v1151 = vld [vmem:[%s4 + $0x20] sm:$0xff]
  %v1152 = vld [vmem:[%s4 + $0x28] sm:$0xff]
  %v1153 = vld [vmem:[%s4 + $0x30] sm:$0xff]
  %v1154 = vld [vmem:[%s4 + $0x38] sm:$0xff]
  %v1155 = vld [vmem:[%s4 + $0x40] sm:$0xff]
  %v1156 = vld [vmem:[%s4 + $0x48] sm:$0xff]
  %v1157 = vld [vmem:[%s4 + $0x50] sm:$0xff]
  %v1158 = vld [vmem:[%s4 + $0x58] sm:$0xff]
  %v1159 = vld [vmem:[%s4 + $0x60] sm:$0xff]
  %v1160 = vld [vmem:[%s4 + $0x68] sm:$0xff]
  %v1161 = vld [vmem:[%s4 + $0x70] sm:$0xff]
  %v1162 = vld [vmem:[%s4 + $0x78] sm:$0xff]
  %v1163 = vpack.c.bf16 %v1116, %v1115
  %v1164 = vpack.c.bf16 %v1118, %v1117
  %v1165 = vpack.c.bf16 %v1120, %v1119
  %v1166 = vpack.c.bf16 %v1122, %v1121
  %v1167 = vpack.c.bf16 %v1124, %v1123
  %v1168 = vpack.c.bf16 %v1126, %v1125
  %v1169 = vpack.c.bf16 %v1128, %v1127
  %v1170 = vpack.c.bf16 %v1130, %v1129
  %v1171 = vpack.c.bf16 %v1132, %v1131
  %v1172 = vpack.c.bf16 %v1134, %v1133
  %v1173 = vpack.c.bf16 %v1136, %v1135
  %v1174 = vpack.c.bf16 %v1138, %v1137
  %v1175 = vpack.c.bf16 %v1140, %v1139
  %v1176 = vpack.c.bf16 %v1142, %v1141
  %v1177 = vpack.c.bf16 %v1144, %v1143
  %v1178 = vpack.c.bf16 %v1146, %v1145
  %1180 = vset.pattern.permute.xlu0 0
  %1181 = vperm.xlu0 %1180, %v705
  %v1182 = vpop.permute.xlu0 %1181
  %1185 = vset.pattern.permute.xlu0 0
  %1186 = vperm.xlu0 %1185, %v706
  %v1187 = vpop.permute.xlu0 %1186
  %1190 = vset.pattern.permute.xlu0 0
  %1191 = vperm.xlu0 %1190, %v707
  %v1192 = vpop.permute.xlu0 %1191
  %1195 = vset.pattern.permute.xlu0 0
  %1196 = vperm.xlu0 %1195, %v708
  %v1197 = vpop.permute.xlu0 %1196
  %1200 = vset.pattern.permute.xlu0 0
  %1201 = vperm.xlu0 %1200, %v709
  %v1202 = vpop.permute.xlu0 %1201
  %1205 = vset.pattern.permute.xlu0 0
  %1206 = vperm.xlu0 %1205, %v710
  %v1207 = vpop.permute.xlu0 %1206
  %1210 = vset.pattern.permute.xlu0 0
  %1211 = vperm.xlu0 %1210, %v711
  %v1212 = vpop.permute.xlu0 %1211
  %1215 = vset.pattern.permute.xlu0 0
  %1216 = vperm.xlu0 %1215, %v712
  %v1217 = vpop.permute.xlu0 %1216
  %1220 = vset.pattern.permute.xlu0 0
  %1221 = vperm.xlu0 %1220, %v713
  %v1222 = vpop.permute.xlu0 %1221
  %1225 = vset.pattern.permute.xlu0 0
  %1226 = vperm.xlu0 %1225, %v714
  %v1227 = vpop.permute.xlu0 %1226
  %1230 = vset.pattern.permute.xlu0 0
  %1231 = vperm.xlu0 %1230, %v715
  %v1232 = vpop.permute.xlu0 %1231
  %1235 = vset.pattern.permute.xlu0 0
  %1236 = vperm.xlu0 %1235, %v716
  %v1237 = vpop.permute.xlu0 %1236
  %1240 = vset.pattern.permute.xlu0 0
  %1241 = vperm.xlu0 %1240, %v717
  %v1242 = vpop.permute.xlu0 %1241
  %1245 = vset.pattern.permute.xlu0 0
  %1246 = vperm.xlu0 %1245, %v718
  %v1247 = vpop.permute.xlu0 %1246
  %1250 = vset.pattern.permute.xlu0 0
  %1251 = vperm.xlu0 %1250, %v719
  %v1252 = vpop.permute.xlu0 %1251
  %1255 = vset.pattern.permute.xlu0 0
  %1256 = vperm.xlu0 %1255, %v720
  %v1257 = vpop.permute.xlu0 %1256
  %v1275 = vunpack.c.l.b16 %v1147
  %v1276 = vunpack.c.h.b16 %v1147
  %v1277 = vunpack.c.l.b16 %v1148
  %v1278 = vunpack.c.h.b16 %v1148
  %v1279 = vunpack.c.l.b16 %v1149
  %v1280 = vunpack.c.h.b16 %v1149
  %v1281 = vunpack.c.l.b16 %v1150
  %v1282 = vunpack.c.h.b16 %v1150
  %v1283 = vunpack.c.l.b16 %v1151
  %v1284 = vunpack.c.h.b16 %v1151
  %v1285 = vunpack.c.l.b16 %v1152
  %v1286 = vunpack.c.h.b16 %v1152
  %v1287 = vunpack.c.l.b16 %v1153
  %v1288 = vunpack.c.h.b16 %v1153
  %v1289 = vunpack.c.l.b16 %v1154
  %v1290 = vunpack.c.h.b16 %v1154
  %v1291 = vunpack.c.l.b16 %v1155
  %v1292 = vunpack.c.h.b16 %v1155
  %v1293 = vunpack.c.l.b16 %v1156
  %v1294 = vunpack.c.h.b16 %v1156
  %v1295 = vunpack.c.l.b16 %v1157
  %v1296 = vunpack.c.h.b16 %v1157
  %v1297 = vunpack.c.l.b16 %v1158
  %v1298 = vunpack.c.h.b16 %v1158
  %v1299 = vunpack.c.l.b16 %v1159
  %v1300 = vunpack.c.h.b16 %v1159
  %v1301 = vunpack.c.l.b16 %v1160
  %v1302 = vunpack.c.h.b16 %v1160
  %v1303 = vunpack.c.l.b16 %v1161
  %v1304 = vunpack.c.h.b16 %v1161
  %v1305 = vunpack.c.l.b16 %v1162
  %v1306 = vunpack.c.h.b16 %v1162
  %v1307 = vpack.c.b16 %v1277, %v1275
  %v1308 = vpack.c.b16 %v1278, %v1276
  %v1309 = vpack.c.b16 %v1281, %v1279
  %v1310 = vpack.c.b16 %v1282, %v1280
  %v1311 = vpack.c.b16 %v1285, %v1283
  %v1312 = vpack.c.b16 %v1286, %v1284
  %v1313 = vpack.c.b16 %v1289, %v1287
  %v1314 = vpack.c.b16 %v1290, %v1288
  %v1315 = vpack.c.b16 %v1293, %v1291
  %v1316 = vpack.c.b16 %v1294, %v1292
  %v1317 = vpack.c.b16 %v1297, %v1295
  %v1318 = vpack.c.b16 %v1298, %v1296
  %v1319 = vpack.c.b16 %v1301, %v1299
  %v1320 = vpack.c.b16 %v1302, %v1300
  %v1321 = vpack.c.b16 %v1305, %v1303
  %v1322 = vpack.c.b16 %v1306, %v1304
  %1339 = vmatpush.bf16.msra.mxu0 %v1170
  %1340 = vmatpush.bf16.msra.mxu0 %v1169
  %1341 = vmatpush.bf16.msra.mxu0 %v1168
  %1342 = vmatpush.bf16.msra.mxu0 %v1167
  %1343 = vmatpush.bf16.msra.mxu0 %v1166
  %1344 = vmatpush.bf16.msra.mxu0 %v1165
  %1345 = vmatpush.bf16.msra.mxu0 %v1164
  %1346 = vmatpush.bf16.msra.mxu0 %v1163
  %1347 = vmatmul.bf16.gmra.mxu0 %v1307
  %v1348 = vpop.f32.mrf.mxu0
  %v1349 = vadd.f32 %v1182, %v1348
  %v1350 = vpop.f32.mrf.mxu0
  %v1351 = vadd.f32 %v1187, %v1350
  %1352 = vmatmul.bf16.gmra.mxu0 %v1309
  %v1353 = vpop.f32.mrf.mxu0
  %v1354 = vadd.f32 %v1192, %v1353
  %v1355 = vpop.f32.mrf.mxu0
  %v1356 = vadd.f32 %v1197, %v1355
  %1357 = vmatmul.bf16.gmra.mxu0 %v1311
  %v1358 = vpop.f32.mrf.mxu0
  %v1359 = vadd.f32 %v1202, %v1358
  %v1360 = vpop.f32.mrf.mxu0
  %v1361 = vadd.f32 %v1207, %v1360
  %1362 = vmatmul.bf16.gmra.mxu0 %v1313
  %v1363 = vpop.f32.mrf.mxu0
  %v1364 = vadd.f32 %v1212, %v1363
  %v1365 = vpop.f32.mrf.mxu0
  %v1366 = vadd.f32 %v1217, %v1365
  %1367 = vmatmul.bf16.gmra.mxu0 %v1315
  %v1368 = vpop.f32.mrf.mxu0
  %v1369 = vadd.f32 %v1222, %v1368
  %v1370 = vpop.f32.mrf.mxu0
  %v1371 = vadd.f32 %v1227, %v1370
  %1372 = vmatmul.bf16.gmra.mxu0 %v1317
  %v1373 = vpop.f32.mrf.mxu0
  %v1374 = vadd.f32 %v1232, %v1373
  %v1375 = vpop.f32.mrf.mxu0
  %v1376 = vadd.f32 %v1237, %v1375
  %1377 = vmatmul.bf16.gmra.mxu0 %v1319
  %v1378 = vpop.f32.mrf.mxu0
  %v1379 = vadd.f32 %v1242, %v1378
  %v1380 = vpop.f32.mrf.mxu0
  %v1381 = vadd.f32 %v1247, %v1380
  %1382 = vmatmul.bf16.gmra.mxu0 %v1321
  %v1383 = vpop.f32.mrf.mxu0
  %v1384 = vadd.f32 %v1252, %v1383
  %v1385 = vpop.f32.mrf.mxu0
  %v1386 = vadd.f32 %v1257, %v1385
  %1387 = vdwg.mxu0
  %1388 = vmatpush.bf16.msra.mxu0 %v1178
  %1389 = vmatpush.bf16.msra.mxu0 %v1177
  %1390 = vmatpush.bf16.msra.mxu0 %v1176
  %1391 = vmatpush.bf16.msra.mxu0 %v1175
  %1392 = vmatpush.bf16.msra.mxu0 %v1174
  %1393 = vmatpush.bf16.msra.mxu0 %v1173
  %1394 = vmatpush.bf16.msra.mxu0 %v1172
  %1395 = vmatpush.bf16.msra.mxu0 %v1171
  %1396 = vmatmul.bf16.gmra.mxu0 %v1308
  %v1397 = vpop.f32.mrf.mxu0
  %v1398 = vadd.f32 %v1349, %v1397
  %v1399 = vpop.f32.mrf.mxu0
  %v1400 = vadd.f32 %v1351, %v1399
  %1401 = vmatmul.bf16.gmra.mxu0 %v1310
  %v1402 = vpop.f32.mrf.mxu0
  %v1403 = vadd.f32 %v1354, %v1402
  %v1404 = vpop.f32.mrf.mxu0
  %v1405 = vadd.f32 %v1356, %v1404
  %1406 = vmatmul.bf16.gmra.mxu0 %v1312
  %v1407 = vpop.f32.mrf.mxu0
  %v1408 = vadd.f32 %v1359, %v1407
  %v1409 = vpop.f32.mrf.mxu0
  %v1410 = vadd.f32 %v1361, %v1409
  %1411 = vmatmul.bf16.gmra.mxu0 %v1314
  %v1412 = vpop.f32.mrf.mxu0
  %v1413 = vadd.f32 %v1364, %v1412
  %v1414 = vpop.f32.mrf.mxu0
  %v1415 = vadd.f32 %v1366, %v1414
  %1416 = vmatmul.bf16.gmra.mxu0 %v1316
  %v1417 = vpop.f32.mrf.mxu0
  %v1418 = vadd.f32 %v1369, %v1417
  %v1419 = vpop.f32.mrf.mxu0
  %v1420 = vadd.f32 %v1371, %v1419
  %1421 = vmatmul.bf16.gmra.mxu0 %v1318
  %v1422 = vpop.f32.mrf.mxu0
  %v1423 = vadd.f32 %v1374, %v1422
  %v1424 = vpop.f32.mrf.mxu0
  %v1425 = vadd.f32 %v1376, %v1424
  %1426 = vmatmul.bf16.gmra.mxu0 %v1320
  %v1427 = vpop.f32.mrf.mxu0
  %v1428 = vadd.f32 %v1379, %v1427
  %v1429 = vpop.f32.mrf.mxu0
  %v1430 = vadd.f32 %v1381, %v1429
  %1431 = vmatmul.bf16.gmra.mxu0 %v1322
  %v1432 = vpop.f32.mrf.mxu0
  %v1433 = vadd.f32 %v1384, %v1432
  %v1434 = vpop.f32.mrf.mxu0
  %v1435 = vadd.f32 %v1386, %v1434
  %1436 = vdwg.mxu0
  %v1437 = vmax.f32 %v1398, 0.0
  %v1438 = vmax.f32 %v1400, 0.0
  %v1439 = vmax.f32 %v1403, 0.0
  %v1440 = vmax.f32 %v1405, 0.0
  %v1441 = vmax.f32 %v1408, 0.0
  %v1442 = vmax.f32 %v1410, 0.0
  %v1443 = vmax.f32 %v1413, 0.0
  %v1444 = vmax.f32 %v1415, 0.0
  %v1445 = vmax.f32 %v1418, 0.0
  %v1446 = vmax.f32 %v1420, 0.0
  %v1447 = vmax.f32 %v1423, 0.0
  %v1448 = vmax.f32 %v1425, 0.0
  %v1449 = vmax.f32 %v1428, 0.0
  %v1450 = vmax.f32 %v1430, 0.0
  %v1451 = vmax.f32 %v1433, 0.0
  %v1452 = vmax.f32 %v1435, 0.0
  %v1453 = vld [vmem:[%s5] sm:$0xf]
  %v1454 = vld [vmem:[%s5 + $0x4] sm:$0xf]
  %v1455 = vld [vmem:[%s5 + $0x8] sm:$0xf]
  %v1456 = vld [vmem:[%s5 + $0xc] sm:$0xf]
  %v1457 = vld [vmem:[%s5 + $0x10] sm:$0xf]
  %v1458 = vld [vmem:[%s5 + $0x14] sm:$0xf]
  %v1459 = vld [vmem:[%s5 + $0x18] sm:$0xf]
  %v1460 = vld [vmem:[%s5 + $0x1c] sm:$0xf]
  %v1461 = vpack.c.bf16 %v1438, %v1437
  %v1462 = vpack.c.bf16 %v1440, %v1439
  %v1463 = vpack.c.bf16 %v1442, %v1441
  %v1464 = vpack.c.bf16 %v1444, %v1443
  %v1465 = vpack.c.bf16 %v1446, %v1445
  %v1466 = vpack.c.bf16 %v1448, %v1447
  %v1467 = vpack.c.bf16 %v1450, %v1449
  %v1468 = vpack.c.bf16 %v1452, %v1451
  %1470 = vset.pattern.permute.xlu0 0
  %1471 = vperm.xlu0 %1470, %v721
  %v1472 = vpop.permute.xlu0 %1471
  %1475 = vset.pattern.permute.xlu0 0
  %1476 = vperm.xlu0 %1475, %v722
  %v1477 = vpop.permute.xlu0 %1476
  %1480 = vset.pattern.permute.xlu0 0
  %1481 = vperm.xlu0 %1480, %v723
  %v1482 = vpop.permute.xlu0 %1481
  %1485 = vset.pattern.permute.xlu0 0
  %1486 = vperm.xlu0 %1485, %v724
  %v1487 = vpop.permute.xlu0 %1486
  %1490 = vset.pattern.permute.xlu0 0
  %1491 = vperm.xlu0 %1490, %v725
  %v1492 = vpop.permute.xlu0 %1491
  %1495 = vset.pattern.permute.xlu0 0
  %1496 = vperm.xlu0 %1495, %v726
  %v1497 = vpop.permute.xlu0 %1496
  %1500 = vset.pattern.permute.xlu0 0
  %1501 = vperm.xlu0 %1500, %v727
  %v1502 = vpop.permute.xlu0 %1501
  %1505 = vset.pattern.permute.xlu0 0
  %1506 = vperm.xlu0 %1505, %v728
  %v1507 = vpop.permute.xlu0 %1506
  %v1517 = vunpack.c.l.b16 %v1453
  %v1518 = vunpack.c.l.b16 %v1454
  %v1519 = vunpack.c.l.b16 %v1455
  %v1520 = vunpack.c.l.b16 %v1456
  %v1521 = vunpack.c.l.b16 %v1457
  %v1522 = vunpack.c.l.b16 %v1458
  %v1523 = vunpack.c.l.b16 %v1459
  %v1524 = vunpack.c.l.b16 %v1460
  %v1525 = vpack.c.b16 %v1518, %v1517
  %v1526 = vpack.c.b16 %v1520, %v1519
  %v1527 = vpack.c.b16 %v1522, %v1521
  %v1528 = vpack.c.b16 %v1524, %v1523
  %1533 = vmatpush.bf16.msra.mxu0 %v1468
  %1534 = vmatpush.bf16.msra.mxu0 %v1467
  %1535 = vmatpush.bf16.msra.mxu0 %v1466
  %1536 = vmatpush.bf16.msra.mxu0 %v1465
  %1537 = vmatpush.bf16.msra.mxu0 %v1464
  %1538 = vmatpush.bf16.msra.mxu0 %v1463
  %1539 = vmatpush.bf16.msra.mxu0 %v1462
  %1540 = vmatpush.bf16.msra.mxu0 %v1461
  %1541 = vmatmul.bf16.gmra.mxu0 %v1525
  %v1542 = vpop.f32.mrf.mxu0
  %v1543 = vadd.f32 %v1472, %v1542
  %v1544 = vpop.f32.mrf.mxu0
  %v1545 = vadd.f32 %v1477, %v1544
  %1546 = vmatmul.bf16.gmra.mxu0 %v1526
  %v1547 = vpop.f32.mrf.mxu0
  %v1548 = vadd.f32 %v1482, %v1547
  %v1549 = vpop.f32.mrf.mxu0
  %v1550 = vadd.f32 %v1487, %v1549
  %1551 = vmatmul.bf16.gmra.mxu0 %v1527
  %v1552 = vpop.f32.mrf.mxu0
  %v1553 = vadd.f32 %v1492, %v1552
  %v1554 = vpop.f32.mrf.mxu0
  %v1555 = vadd.f32 %v1497, %v1554
  %1556 = vmatmul.bf16.gmra.mxu0 %v1528
  %v1557 = vpop.f32.mrf.mxu0
  %v1558 = vadd.f32 %v1502, %v1557
  %v1559 = vpop.f32.mrf.mxu0
  %v1560 = vadd.f32 %v1507, %v1559
  %1561 = vdwg.mxu0
  %v1562 = vmax.f32 %v1543, 0.0
  %v1563 = vmax.f32 %v1545, 0.0
  %v1564 = vmax.f32 %v1548, 0.0
  %v1565 = vmax.f32 %v1550, 0.0
  %v1566 = vmax.f32 %v1553, 0.0
  %v1567 = vmax.f32 %v1555, 0.0
  %v1568 = vmax.f32 %v1558, 0.0
  %v1569 = vmax.f32 %v1560, 0.0
  %1571 = vset.pattern.permute.xlu0 0
  %1572 = vperm.xlu0 %1571, %v729
  %v1573 = vpop.permute.xlu0 %1572
  %1576 = vset.pattern.permute.xlu0 0
  %1577 = vperm.xlu0 %1576, %v730
  %v1578 = vpop.permute.xlu0 %1577
  %1581 = vset.pattern.permute.xlu0 0
  %1582 = vperm.xlu0 %1581, %v731
  %v1583 = vpop.permute.xlu0 %1582
  %1586 = vset.pattern.permute.xlu0 0
  %1587 = vperm.xlu0 %1586, %v732
  %v1588 = vpop.permute.xlu0 %1587
  %1591 = vset.pattern.permute.xlu0 0
  %1592 = vperm.xlu0 %1591, %v733
  %v1593 = vpop.permute.xlu0 %1592
  %1596 = vset.pattern.permute.xlu0 0
  %1597 = vperm.xlu0 %1596, %v734
  %v1598 = vpop.permute.xlu0 %1597
  %1601 = vset.pattern.permute.xlu0 0
  %1602 = vperm.xlu0 %1601, %v735
  %v1603 = vpop.permute.xlu0 %1602
  %1606 = vset.pattern.permute.xlu0 0
  %1607 = vperm.xlu0 %1606, %v736
  %v1608 = vpop.permute.xlu0 %1607
  %v1610 = vmul.f32 %v1562, %v1573
  %v1611 = vmul.f32 %v1563, %v1578
  %v1612 = vmul.f32 %v1564, %v1583
  %v1613 = vmul.f32 %v1565, %v1588
  %v1614 = vmul.f32 %v1566, %v1593
  %v1615 = vmul.f32 %v1567, %v1598
  %v1616 = vmul.f32 %v1568, %v1603
  %v1617 = vmul.f32 %v1569, %v1608
  %v1618 = vadd.f32 %v1610, %v1611
  %v1619 = vadd.f32 %v1618, %v1612
  %v1620 = vadd.f32 %v1619, %v1613
  %v1621 = vadd.f32 %v1620, %v1614
  %v1622 = vadd.f32 %v1621, %v1615
  %v1623 = vadd.f32 %v1622, %v1616
  %v1624 = vadd.f32 %v1623, %v1617
  %v1625 = vrot.slane %v1624, 4
  %v1626 = vadd.f32 %v1624, %v1625
  %v1627 = vrot.slane %v1626, 2
  %v1628 = vadd.f32 %v1626, %v1627
  %v1629 = vrot.slane %v1628, 1
  %v1630 = vadd.f32 %v1628, %v1629
  %v1631 = vadd.f32 %v608, %v1630
  %1633 = vset.pattern.permute.xlu0 0
  %1634 = vperm.xlu0 %1633, %v737
  %v1635 = vpop.permute.xlu0 %1634
  %v1637 = vadd.f32 %v1631, %v1635
  %v1638 = vxor.u32 %v1637, 2147483648
  %v1639 = vmul.f32 %v1638, 1.442695
  %v1640 = vpow.pop %v1639
  %v1641 = vadd.f32 %v1640, 1.0
  %v1642 = vrcp.pop %v1641
  %v1643 = vmul.f32 %v1641, %v1642
  %v1644 = vsub.f32 1.0, %v1643
  %v1645 = vmul.f32 %v1642, %v1644
  %v1646 = vadd.f32 %v1642, %v1645
  %vm1647 = vweird.f32 %v1641
  %vm1648 = vweird.f32 %v1642
  %vm1649 = vmor %vm1647, %vm1648
  %v1650 = vsel %vm1649, %v1642, %v1646
  %v1651 = vand.u32 2147483647, %v1641
  %vm1652 = vcmp.eq.f32.partialorder %v1651, 8.507059e+37
  %v1653 = vand.u32 %v1641, 2147483648
  %v1654 = vor.u32 1.1754944e-38, %v1653
  %v1655 = vsel %vm1652, %v1654, %v1650
  %v1656 = vmul.f32 1.0, %v1655
  %1657 = vst [vmem:[%s7] sm:$0x1] %v1656
  // Predicated region
  $region30: #{ncf_forward.1} parent=0 // pred_check
    _
  $region31: #{ncf_forward.1} parent=0 // pred_check_branch
    %1659 = sbr.rel (0) target = $region33
  $region32: #{ncf_forward.1} parent=0 // pred_region
    _
  $region33: #{ncf_forward.1} parent=0 // pred_fallthru
    _
  // Predicated region
  $region34: #{ncf_forward.1} parent=0 // pred_check
    _
  $region35: #{ncf_forward.1} parent=0 // pred_check_branch
    %1661 = sbr.rel (0) target = $region37
  $region36: #{ncf_forward.1} parent=0 // pred_region
    _
  $region37: #{ncf_forward.1} parent=0 // pred_fallthru
    _

</llo_original>
